<compile_context>
chip_gen: v6e
topology: v6e:2x2x1
jax: 0.10.0
libtpu: 0.0.40
codegen_flags: <defaults>
</compile_context>

<pallas_src>
import functools

import jax
import jax.numpy as jnp
from jax import lax
from jax.experimental import pallas as pl
from jax.experimental.pallas import tpu as pltpu


# --------------------------- dropout keep mask ------------------------------ #
def _keep_mask(shape, seed_u32, row_off_u32, threshold_i32):
    """Counter-based integer hash -> per-element keep mask (1.0 keep / 0.0 drop).

    Pure 32-bit integer VPU ops (iota / mul / xor / shift / compare), so it
    lowers on TPU Mosaic and on the CPU interpreter alike.  The global row
    index (tile offset + local row) is part of the counter, so different grid
    tiles get decorrelated masks.
    """
    rows = lax.broadcasted_iota(jnp.uint32, shape, 0) + row_off_u32
    cols = lax.broadcasted_iota(jnp.uint32, shape, 1)
    x = (rows * jnp.uint32(0x9E3779B1)) ^ (cols * jnp.uint32(0x85EBCA77)) ^ seed_u32
    x = x ^ (x >> jnp.uint32(16))
    x = x * jnp.uint32(0x7FEB352D)
    x = x ^ (x >> jnp.uint32(15))
    x = x * jnp.uint32(0x846CA68B)
    x = x ^ (x >> jnp.uint32(16))
    # drop the sign bit -> uniform int in [0, 2^31); keep iff >= p * 2^31
    r = lax.bitcast_convert_type(x & jnp.uint32(0x7FFFFFFF), jnp.int32)
    return (r >= threshold_i32).astype(jnp.float32)


# ----------------------------- Pallas kernel -------------------------------- #
def _char_word_kernel(seed_ref, lengths_ref, ids_ref, word_ref,
                      proj_ref, whh_ref, b_ref, out_ref,
                      *, num_steps, hidden, word_dim, char_vocab,
                      tile_n, dropout_p):
    """Fused char-LSTM + concat + dropout for one tile of N = B*S rows.

    seed_ref    : SMEM (1,) int32 (scalar prefetch)   dropout seed
    lengths_ref : VMEM (TN, 1)  int32                 chars per word (0 = pad row)
    ids_ref     : VMEM (TN, L)  int32                 char ids
    word_ref    : VMEM (TN, De) f32                   word embeddings
    proj_ref    : VMEM (Cv, 4H) bf16                  char_table @ wih (fused table)
    whh_ref     : VMEM (H, 4H)  bf16                  LSTM hidden->hidden weights
    b_ref       : VMEM (1, 4H)  f32                   LSTM bias
    out_ref     : VMEM (TN, De + H) f32               dropout(concat(word, char_h))

    Gate column order convention: (input, forget, output, cell-candidate), so the
    sigmoid covers one contiguous 3H lane slab and tanh covers the last H lanes.
    """
    L, TN, H, De, Cv = num_steps, tile_n, hidden, word_dim, char_vocab

    lengths = lengths_ref[...]                                   # [TN, 1] int32
    proj = proj_ref[...]                                         # [Cv, 4H] bf16
    whh = whh_ref[...]                                           # [H, 4H]  bf16
    bias = b_ref[...]                                            # [1, 4H]  f32

    # --- fused char-embedding gather + input projection (one MXU matmul):
    #     one_hot(ids) @ (char_table @ wih)  ==  char_table[ids] @ wih
    ids_t = ids_ref[...].T                                       # [L, TN] int32 (tiny transpose)
    iota_c = lax.broadcasted_iota(jnp.int32, (L, TN, Cv), 2)
    onehot = (ids_t[:, :, None] == iota_c).astype(jnp.bfloat16)  # [L, TN, Cv]
    g_in = jnp.dot(onehot.reshape(L * TN, Cv), proj,
                   preferred_element_type=jnp.float32)           # [L*TN, 4H] f32
    g_in = (g_in + bias).reshape(L, TN, 4 * H)

    # --- serial LSTM recurrence (fully unrolled; L is small & static).
    h = jnp.zeros((TN, H), jnp.float32)
    c = jnp.zeros((TN, H), jnp.float32)
    for t in range(L):
        g = g_in[t] + jnp.dot(h.astype(whh.dtype), whh,
                              preferred_element_type=jnp.float32)  # [TN, 4H]
        sig = jax.nn.sigmoid(g[:, :3 * H])        # one contiguous EUP slab (i, f, o)
        g_cand = jnp.tanh(g[:, 3 * H:])           # cell candidate
        i_g = sig[:, :H]
        f_g = sig[:, H:2 * H]
        o_g = sig[:, 2 * H:3 * H]
        c_new = f_g * c + i_g * g_cand
        h_new = o_g * jnp.tanh(c_new)
        # keep updating only while t < length -> final h == hidden at length-1
        valid = t < lengths                                        # [TN, 1] bool
        h = jnp.where(valid, h_new, h)
        c = jnp.where(valid, c_new, c)

    # --- concat + inverted dropout: single lane-dense [TN, De+H] store.
    word = word_ref[...]                                           # [TN, De] f32
    merged = jnp.concatenate([word, h], axis=-1)                   # [TN, De+H]

    if dropout_p > 0.0:
        scale = jnp.float32(1.0 / (1.0 - dropout_p))
        thr = jnp.int32(min(int(round(dropout_p * float(1 << 31))), (1 << 31) - 1))
        seed = seed_ref[0].astype(jnp.uint32)
        row_off = (pl.program_id(0) * TN).astype(jnp.uint32)       # per-tile decorrelation
        keep = _keep_mask((TN, De + H), seed, row_off, thr)
        out_ref[...] = merged * keep * scale
    else:  # eval mode: skip the PRNG path entirely
        out_ref[...] = merged


# ----------------------------- tile selection -------------------------------- #
def _vmem_capacity_bytes():
    cap = 64 * 1024 * 1024  # conservative default (v7x per-TensorCore VMEM)
    try:
        info = pltpu.get_tpu_info()
        cap = int(getattr(info, "vmem_capacity_bytes", cap))
    except Exception:
        pass
    return cap


def _pick_tile_n(n_pad, L, De, H, Cv, vmem_cap):
    """Largest multiple-of-16 tile that fits a VMEM budget; prefer grid >= 4."""
    budget = int(0.55 * vmem_cap)

    def lane(d):  # lane-dim padding to 128
        return ((d + 127) // 128) * 128

    def vmem_bytes(tn):
        # BlockSpec-visible blocks are double-buffered (x2):
        blocks = 2 * tn * (lane(1) * 4            # lengths (int32)
                           + lane(L) * 4          # char ids (int32)
                           + lane(De) * 4         # word emb (f32)
                           + lane(De + H) * 4)    # output (f32)
        resident = 2 * (Cv * 4 * H * 2 + H * 4 * H * 2 + lane(4 * H) * 4)
        # in-kernel temporaries NOT visible to BlockSpec sizing:
        temps = (L * tn * 4 * H * 4               # g_in (f32)
                 + L * tn * lane(Cv) * 2          # one-hot (bf16)
                 + 8 * tn * 4 * H * 4)            # per-step gate slabs / h / c slack
        return blocks + resident + temps

    cands = [d for d in range(16, min(n_pad, 1024) + 1, 16) if n_pad % d == 0]
    cands.sort(reverse=True)
    # Prefer >= 4 grid tiles (keeps both v7x TensorCores fed and gives the
    # pipeline slack); otherwise the largest tile that fits the budget.
    for min_grid in (4, 2, 1):
        for tn in cands:
            if n_pad // tn >= min_grid and vmem_bytes(tn) <= budget:
                return tn
    return 16


# ------------------------------ JAX wrapper --------------------------------- #
def char_word_embedding_forward(word_ids, char_ids, char_lens, params,
                                *, dropout_p=0.5, seed=0, tile_n=None):
    """Replicates CharWordEmbedding.forward (training-mode dropout after concat)."""
    assert 0.0 <= dropout_p < 1.0, "dropout_p must be in [0, 1)"

    word_table = params["word_table"]     # [V, De]  f32
    char_table = params["char_table"]     # [Cv, Dc] f32
    wih = params["wih"]                   # [Dc, 4H] f32
    whh = params["whh"]                   # [H, 4H]  f32
    bias = params["bias"]                 # [1, 4H]  f32

    B, S = word_ids.shape
    L = char_ids.shape[2]
    De = word_table.shape[1]
    Cv = char_table.shape[0]
    H = whh.shape[0]
    N = B * S

    # Word-embedding lookup in plain JAX (gather), kept f32 for parity with the
    # f32 reference.  The char-embedding table is folded into the LSTM input
    # projection (done once, outside the kernel); only 4-byte char ids are DMA'd.
    word_emb = jnp.take(word_table, word_ids.reshape(N), axis=0)      # [N, De] f32
    ids2d = char_ids.reshape(N, L).astype(jnp.int32)                  # [N, L]
    lengths2d = char_lens.reshape(N, 1).astype(jnp.int32)             # [N, 1]
    proj = jnp.dot(char_table, wih).astype(jnp.bfloat16)              # [Cv, 4H] bf16

    # Pad the flattened row axis to a multiple of 16 (bf16 / sublane-tile safe).
    N_pad = ((N + 15) // 16) * 16
    if N_pad != N:
        pad = N_pad - N
        word_emb = jnp.pad(word_emb, ((0, pad), (0, 0)))
        ids2d = jnp.pad(ids2d, ((0, pad), (0, 0)))
        lengths2d = jnp.pad(lengths2d, ((0, pad), (0, 0)))  # length 0 -> h stays 0

    vmem_cap = _vmem_capacity_bytes()
    if tile_n is None:
        tile_n = _pick_tile_n(N_pad, L, De, H, Cv, vmem_cap)
    assert N_pad % tile_n == 0 and tile_n % 16 == 0, (N_pad, tile_n)

    kernel = functools.partial(
        _char_word_kernel, num_steps=L, hidden=H, word_dim=De,
        char_vocab=Cv, tile_n=tile_n, dropout_p=float(dropout_p))

    grid_spec = pltpu.PrefetchScalarGridSpec(
        num_scalar_prefetch=1,                      # dropout seed -> SMEM
        grid=(N_pad // tile_n,),
        in_specs=[
            pl.BlockSpec((tile_n, 1), lambda i, s: (i, 0)),          # lengths
            pl.BlockSpec((tile_n, L), lambda i, s: (i, 0)),          # char ids
            pl.BlockSpec((tile_n, De), lambda i, s: (i, 0)),         # word emb (f32)
            pl.BlockSpec((Cv, 4 * H), lambda i, s: (0, 0)),          # proj (resident)
            pl.BlockSpec((H, 4 * H), lambda i, s: (0, 0)),           # whh (resident)
            pl.BlockSpec((1, 4 * H), lambda i, s: (0, 0)),           # bias (resident)
        ],
        out_specs=pl.BlockSpec((tile_n, De + H), lambda i, s: (i, 0)),
    )

    seed_arr = jnp.array([seed], dtype=jnp.int32)

    out = pl.pallas_call(
        kernel,
        out_shape=jax.ShapeDtypeStruct((N_pad, De + H), jnp.float32),
        grid_spec=grid_spec,
        compiler_params=pltpu.CompilerParams(
            dimension_semantics=("parallel",),       # shard tiles across TCs (v7x)
            vmem_limit_bytes=int(0.70 * vmem_cap)),
    )(seed_arr, lengths2d, ids2d, word_emb,
      proj, whh.astype(jnp.bfloat16), bias.astype(jnp.float32))

    return out[:N].reshape(B, S, De + H)


# --------------------------- deterministic params --------------------------- #
def init_params(key, vocab, char_vocab, word_dim, char_dim, hidden):
    ks = jax.random.split(key, 5)
    scale = 0.1
    return {
        "word_table": scale * jax.random.normal(ks[0], (vocab, word_dim), jnp.float32),
        "char_table": scale * jax.random.normal(ks[1], (char_vocab, char_dim), jnp.float32),
        "wih": scale * jax.random.normal(ks[2], (char_dim, 4 * hidden), jnp.float32),
        "whh": scale * jax.random.normal(ks[3], (hidden, 4 * hidden), jnp.float32),
        "bias": scale * jax.random.normal(ks[4], (1, 4 * hidden), jnp.float32),
    }


if __name__ == "__main__":
    # Small shapes consistent with the module's forward. Chosen so that
    # 4H = 128 (lane-dense gates) and De + H = 128 (lane-dense output store).
    B, S, L = 2, 16, 8         # batch, word-seq len, chars per word
    V, Cv = 50, 20             # word vocab, char vocab
    De, Dc, H = 96, 16, 32     # word emb dim, char emb dim, char-RNN hidden dim

    key = jax.random.PRNGKey(0)
    k_params, k_w, k_c, k_l = jax.random.split(key, 4)

    params = init_params(k_params, V, Cv, De, Dc, H)
    word_ids = jax.random.randint(k_w, (B, S), 0, V, dtype=jnp.int32)
    char_ids = jax.random.randint(k_c, (B, S, L), 0, Cv, dtype=jnp.int32)
    char_lens = jax.random.randint(k_l, (B, S), 1, L + 1, dtype=jnp.int32)

    # auto tile picker -> tile_n=16, grid=(2,), exercising the tiled/parallel path.
    out = char_word_embedding_forward(word_ids, char_ids, char_lens, params,
                                      dropout_p=0.5, seed=1234)
    jax.block_until_ready(out)
    assert out.shape == (B, S, De + H), out.shape
    assert bool(jnp.isfinite(out).all())
    print("KERNEL_OK")
</pallas_src>

<mosaic_0001>
module attributes {stable_mosaic.version = 11 : i64} {
  func.func @_char_word_kernel(%arg0: i32, %arg1: memref<1xi32, #tpu.memory_space<smem>>, %arg2: memref<16x1xi32, #tpu.memory_space<vmem>>, %arg3: memref<16x8xi32, #tpu.memory_space<vmem>>, %arg4: memref<16x96xf32, #tpu.memory_space<vmem>>, %arg5: memref<20x128xbf16, #tpu.memory_space<vmem>>, %arg6: memref<32x128xbf16, #tpu.memory_space<vmem>>, %arg7: memref<1x128xf32, #tpu.memory_space<vmem>>, %arg8: memref<16x128xf32, #tpu.memory_space<vmem>>) attributes {dimension_semantics = [#tpu.dimension_semantics<parallel>], iteration_bounds = array<i64: 2>, scalar_prefetch = 1 : i64, scratch_operands = 0 : i64, tpu.core_type = #tpu.core_type<tc>, window_params = [{transform_indices = @transform_0, window_bounds = array<i64: 16, 1>}, {transform_indices = @transform_1, window_bounds = array<i64: 16, 8>}, {transform_indices = @transform_2, window_bounds = array<i64: 16, 96>}, {pipeline_mode = #tpu.pipeline_mode<synchronous>, transform_indices = @transform_3, window_bounds = array<i64: 20, 128>}, {pipeline_mode = #tpu.pipeline_mode<synchronous>, transform_indices = @transform_4, window_bounds = array<i64: 32, 128>}, {pipeline_mode = #tpu.pipeline_mode<synchronous>, transform_indices = @transform_5, window_bounds = array<i64: 1, 128>}, {transform_indices = @transform_6, window_bounds = array<i64: 16, 128>}]} {
    %c0 = arith.constant 0 : index
    %c0_0 = arith.constant 0 : index
    %0 = vector.load %arg2[%c0, %c0_0] : memref<16x1xi32, #tpu.memory_space<vmem>>, vector<16x1xi32>
    %c0_1 = arith.constant 0 : index
    %c0_2 = arith.constant 0 : index
    %1 = vector.load %arg5[%c0_1, %c0_2] : memref<20x128xbf16, #tpu.memory_space<vmem>>, vector<20x128xbf16>
    %c0_3 = arith.constant 0 : index
    %c0_4 = arith.constant 0 : index
    %2 = vector.load %arg6[%c0_3, %c0_4] : memref<32x128xbf16, #tpu.memory_space<vmem>>, vector<32x128xbf16>
    %c0_5 = arith.constant 0 : index
    %c0_6 = arith.constant 0 : index
    %3 = vector.load %arg7[%c0_5, %c0_6] : memref<1x128xf32, #tpu.memory_space<vmem>>, vector<1x128xf32>
    %c0_7 = arith.constant 0 : index
    %c0_8 = arith.constant 0 : index
    %4 = vector.load %arg3[%c0_7, %c0_8] : memref<16x8xi32, #tpu.memory_space<vmem>>, vector<16x8xi32>
    %5 = tpu.transpose %4, [1, 0] : vector<16x8xi32> -> vector<8x16xi32>
    %6 = tpu.iota {dimensions = array<i32: 2>} : vector<8x16x20xi32>
    %7 = vector.shape_cast %5 : vector<8x16xi32> to vector<8x16x1xi32>
    %8 = vector.broadcast %7 : vector<8x16x1xi32> to vector<8x16x20xi32>
    %9 = arith.cmpi eq, %8, %6 : vector<8x16x20xi32>
    %10 = arith.extui %9 : vector<8x16x20xi1> to vector<8x16x20xi32>
    %11 = arith.sitofp %10 : vector<8x16x20xi32> to vector<8x16x20xf32>
    %12 = arith.truncf %11 : vector<8x16x20xf32> to vector<8x16x20xbf16>
    %13 = vector.shape_cast %12 : vector<8x16x20xbf16> to vector<128x20xbf16>
    %cst = arith.constant dense<0.000000e+00> : vector<128x128xf32>
    %14 = tpu.matmul %13, %1, %cst {dimension_numbers = #tpu.dot_dimension_numbers<[1], [0], [0], [1], [0, 0, 1, 1], [], []>} : vector<128x20xbf16>, vector<20x128xbf16>, vector<128x128xf32> -> vector<128x128xf32>
    %15 = vector.broadcast %3 : vector<1x128xf32> to vector<128x128xf32>
    %16 = arith.addf %14, %15 : vector<128x128xf32>
    %17 = vector.shape_cast %16 : vector<128x128xf32> to vector<8x16x128xf32>
    %cst_9 = arith.constant 0.000000e+00 : f32
    %18 = vector.broadcast %cst_9 : f32 to vector<16x32xf32>
    %cst_10 = arith.constant 0.000000e+00 : f32
    %19 = vector.broadcast %cst_10 : f32 to vector<16x32xf32>
    %20 = vector.extract_strided_slice %17 {offsets = [0, 0, 0], sizes = [1, 16, 128], strides = [1, 1, 1]} : vector<8x16x128xf32> to vector<1x16x128xf32>
    %21 = vector.shape_cast %20 : vector<1x16x128xf32> to vector<16x128xf32>
    %22 = arith.truncf %18 : vector<16x32xf32> to vector<16x32xbf16>
    %cst_11 = arith.constant dense<0.000000e+00> : vector<16x128xf32>
    %23 = tpu.matmul %22, %2, %cst_11 {dimension_numbers = #tpu.dot_dimension_numbers<[1], [0], [0], [1], [0, 0, 1, 1], [], []>} : vector<16x32xbf16>, vector<32x128xbf16>, vector<16x128xf32> -> vector<16x128xf32>
    %24 = arith.addf %21, %23 : vector<16x128xf32>
    %25 = vector.extract_strided_slice %24 {offsets = [0, 0], sizes = [16, 96], strides = [1, 1]} : vector<16x128xf32> to vector<16x96xf32>
    %26 = arith.negf %25 : vector<16x96xf32>
    %27 = math.exp %26 : vector<16x96xf32>
    %cst_12 = arith.constant 1.000000e+00 : f32
    %28 = vector.broadcast %cst_12 : f32 to vector<16x96xf32>
    %29 = arith.addf %28, %27 : vector<16x96xf32>
    %30 = arith.divf %28, %29 : vector<16x96xf32>
    %31 = vector.extract_strided_slice %24 {offsets = [0, 96], sizes = [16, 32], strides = [1, 1]} : vector<16x128xf32> to vector<16x32xf32>
    %32 = math.tanh %31 : vector<16x32xf32>
    %33 = vector.extract_strided_slice %30 {offsets = [0, 0], sizes = [16, 32], strides = [1, 1]} : vector<16x96xf32> to vector<16x32xf32>
    %34 = vector.extract_strided_slice %30 {offsets = [0, 32], sizes = [16, 32], strides = [1, 1]} : vector<16x96xf32> to vector<16x32xf32>
    %35 = vector.extract_strided_slice %30 {offsets = [0, 64], sizes = [16, 32], strides = [1, 1]} : vector<16x96xf32> to vector<16x32xf32>
    %36 = arith.mulf %34, %19 : vector<16x32xf32>
    %37 = arith.mulf %33, %32 : vector<16x32xf32>
    %38 = arith.addf %36, %37 : vector<16x32xf32>
    %39 = math.tanh %38 : vector<16x32xf32>
    %40 = arith.mulf %35, %39 : vector<16x32xf32>
    %c0_i32 = arith.constant 0 : i32
    %41 = vector.broadcast %c0_i32 : i32 to vector<16x1xi32>
    %42 = arith.cmpi sgt, %0, %41 : vector<16x1xi32>
    %43 = vector.shape_cast %42 : vector<16x1xi1> to vector<16x1xi1>
    %44 = vector.broadcast %43 : vector<16x1xi1> to vector<16x32xi1>
    %45 = arith.select %44, %40, %18 : vector<16x32xi1>, vector<16x32xf32>
    %46 = vector.shape_cast %42 : vector<16x1xi1> to vector<16x1xi1>
    %47 = vector.broadcast %46 : vector<16x1xi1> to vector<16x32xi1>
    %48 = arith.select %47, %38, %19 : vector<16x32xi1>, vector<16x32xf32>
    %49 = vector.extract_strided_slice %17 {offsets = [1, 0, 0], sizes = [1, 16, 128], strides = [1, 1, 1]} : vector<8x16x128xf32> to vector<1x16x128xf32>
    %50 = vector.shape_cast %49 : vector<1x16x128xf32> to vector<16x128xf32>
    %51 = arith.truncf %45 : vector<16x32xf32> to vector<16x32xbf16>
    %cst_13 = arith.constant dense<0.000000e+00> : vector<16x128xf32>
    %52 = tpu.matmul %51, %2, %cst_13 {dimension_numbers = #tpu.dot_dimension_numbers<[1], [0], [0], [1], [0, 0, 1, 1], [], []>} : vector<16x32xbf16>, vector<32x128xbf16>, vector<16x128xf32> -> vector<16x128xf32>
    %53 = arith.addf %50, %52 : vector<16x128xf32>
    %54 = vector.extract_strided_slice %53 {offsets = [0, 0], sizes = [16, 96], strides = [1, 1]} : vector<16x128xf32> to vector<16x96xf32>
    %55 = arith.negf %54 : vector<16x96xf32>
    %56 = math.exp %55 : vector<16x96xf32>
    %cst_14 = arith.constant 1.000000e+00 : f32
    %57 = vector.broadcast %cst_14 : f32 to vector<16x96xf32>
    %58 = arith.addf %57, %56 : vector<16x96xf32>
    %59 = arith.divf %57, %58 : vector<16x96xf32>
    %60 = vector.extract_strided_slice %53 {offsets = [0, 96], sizes = [16, 32], strides = [1, 1]} : vector<16x128xf32> to vector<16x32xf32>
    %61 = math.tanh %60 : vector<16x32xf32>
    %62 = vector.extract_strided_slice %59 {offsets = [0, 0], sizes = [16, 32], strides = [1, 1]} : vector<16x96xf32> to vector<16x32xf32>
    %63 = vector.extract_strided_slice %59 {offsets = [0, 32], sizes = [16, 32], strides = [1, 1]} : vector<16x96xf32> to vector<16x32xf32>
    %64 = vector.extract_strided_slice %59 {offsets = [0, 64], sizes = [16, 32], strides = [1, 1]} : vector<16x96xf32> to vector<16x32xf32>
    %65 = arith.mulf %63, %48 : vector<16x32xf32>
    %66 = arith.mulf %62, %61 : vector<16x32xf32>
    %67 = arith.addf %65, %66 : vector<16x32xf32>
    %68 = math.tanh %67 : vector<16x32xf32>
    %69 = arith.mulf %64, %68 : vector<16x32xf32>
    %c1_i32 = arith.constant 1 : i32
    %70 = vector.broadcast %c1_i32 : i32 to vector<16x1xi32>
    %71 = arith.cmpi sgt, %0, %70 : vector<16x1xi32>
    %72 = vector.shape_cast %71 : vector<16x1xi1> to vector<16x1xi1>
    %73 = vector.broadcast %72 : vector<16x1xi1> to vector<16x32xi1>
    %74 = arith.select %73, %69, %45 : vector<16x32xi1>, vector<16x32xf32>
    %75 = vector.shape_cast %71 : vector<16x1xi1> to vector<16x1xi1>
    %76 = vector.broadcast %75 : vector<16x1xi1> to vector<16x32xi1>
    %77 = arith.select %76, %67, %48 : vector<16x32xi1>, vector<16x32xf32>
    %78 = vector.extract_strided_slice %17 {offsets = [2, 0, 0], sizes = [1, 16, 128], strides = [1, 1, 1]} : vector<8x16x128xf32> to vector<1x16x128xf32>
    %79 = vector.shape_cast %78 : vector<1x16x128xf32> to vector<16x128xf32>
    %80 = arith.truncf %74 : vector<16x32xf32> to vector<16x32xbf16>
    %cst_15 = arith.constant dense<0.000000e+00> : vector<16x128xf32>
    %81 = tpu.matmul %80, %2, %cst_15 {dimension_numbers = #tpu.dot_dimension_numbers<[1], [0], [0], [1], [0, 0, 1, 1], [], []>} : vector<16x32xbf16>, vector<32x128xbf16>, vector<16x128xf32> -> vector<16x128xf32>
    %82 = arith.addf %79, %81 : vector<16x128xf32>
    %83 = vector.extract_strided_slice %82 {offsets = [0, 0], sizes = [16, 96], strides = [1, 1]} : vector<16x128xf32> to vector<16x96xf32>
    %84 = arith.negf %83 : vector<16x96xf32>
    %85 = math.exp %84 : vector<16x96xf32>
    %cst_16 = arith.constant 1.000000e+00 : f32
    %86 = vector.broadcast %cst_16 : f32 to vector<16x96xf32>
    %87 = arith.addf %86, %85 : vector<16x96xf32>
    %88 = arith.divf %86, %87 : vector<16x96xf32>
    %89 = vector.extract_strided_slice %82 {offsets = [0, 96], sizes = [16, 32], strides = [1, 1]} : vector<16x128xf32> to vector<16x32xf32>
    %90 = math.tanh %89 : vector<16x32xf32>
    %91 = vector.extract_strided_slice %88 {offsets = [0, 0], sizes = [16, 32], strides = [1, 1]} : vector<16x96xf32> to vector<16x32xf32>
    %92 = vector.extract_strided_slice %88 {offsets = [0, 32], sizes = [16, 32], strides = [1, 1]} : vector<16x96xf32> to vector<16x32xf32>
    %93 = vector.extract_strided_slice %88 {offsets = [0, 64], sizes = [16, 32], strides = [1, 1]} : vector<16x96xf32> to vector<16x32xf32>
    %94 = arith.mulf %92, %77 : vector<16x32xf32>
    %95 = arith.mulf %91, %90 : vector<16x32xf32>
    %96 = arith.addf %94, %95 : vector<16x32xf32>
    %97 = math.tanh %96 : vector<16x32xf32>
    %98 = arith.mulf %93, %97 : vector<16x32xf32>
    %c2_i32 = arith.constant 2 : i32
    %99 = vector.broadcast %c2_i32 : i32 to vector<16x1xi32>
    %100 = arith.cmpi sgt, %0, %99 : vector<16x1xi32>
    %101 = vector.shape_cast %100 : vector<16x1xi1> to vector<16x1xi1>
    %102 = vector.broadcast %101 : vector<16x1xi1> to vector<16x32xi1>
    %103 = arith.select %102, %98, %74 : vector<16x32xi1>, vector<16x32xf32>
    %104 = vector.shape_cast %100 : vector<16x1xi1> to vector<16x1xi1>
    %105 = vector.broadcast %104 : vector<16x1xi1> to vector<16x32xi1>
    %106 = arith.select %105, %96, %77 : vector<16x32xi1>, vector<16x32xf32>
    %107 = vector.extract_strided_slice %17 {offsets = [3, 0, 0], sizes = [1, 16, 128], strides = [1, 1, 1]} : vector<8x16x128xf32> to vector<1x16x128xf32>
    %108 = vector.shape_cast %107 : vector<1x16x128xf32> to vector<16x128xf32>
    %109 = arith.truncf %103 : vector<16x32xf32> to vector<16x32xbf16>
    %cst_17 = arith.constant dense<0.000000e+00> : vector<16x128xf32>
    %110 = tpu.matmul %109, %2, %cst_17 {dimension_numbers = #tpu.dot_dimension_numbers<[1], [0], [0], [1], [0, 0, 1, 1], [], []>} : vector<16x32xbf16>, vector<32x128xbf16>, vector<16x128xf32> -> vector<16x128xf32>
    %111 = arith.addf %108, %110 : vector<16x128xf32>
    %112 = vector.extract_strided_slice %111 {offsets = [0, 0], sizes = [16, 96], strides = [1, 1]} : vector<16x128xf32> to vector<16x96xf32>
    %113 = arith.negf %112 : vector<16x96xf32>
    %114 = math.exp %113 : vector<16x96xf32>
    %cst_18 = arith.constant 1.000000e+00 : f32
    %115 = vector.broadcast %cst_18 : f32 to vector<16x96xf32>
    %116 = arith.addf %115, %114 : vector<16x96xf32>
    %117 = arith.divf %115, %116 : vector<16x96xf32>
    %118 = vector.extract_strided_slice %111 {offsets = [0, 96], sizes = [16, 32], strides = [1, 1]} : vector<16x128xf32> to vector<16x32xf32>
    %119 = math.tanh %118 : vector<16x32xf32>
    %120 = vector.extract_strided_slice %117 {offsets = [0, 0], sizes = [16, 32], strides = [1, 1]} : vector<16x96xf32> to vector<16x32xf32>
    %121 = vector.extract_strided_slice %117 {offsets = [0, 32], sizes = [16, 32], strides = [1, 1]} : vector<16x96xf32> to vector<16x32xf32>
    %122 = vector.extract_strided_slice %117 {offsets = [0, 64], sizes = [16, 32], strides = [1, 1]} : vector<16x96xf32> to vector<16x32xf32>
    %123 = arith.mulf %121, %106 : vector<16x32xf32>
    %124 = arith.mulf %120, %119 : vector<16x32xf32>
    %125 = arith.addf %123, %124 : vector<16x32xf32>
    %126 = math.tanh %125 : vector<16x32xf32>
    %127 = arith.mulf %122, %126 : vector<16x32xf32>
    %c3_i32 = arith.constant 3 : i32
    %128 = vector.broadcast %c3_i32 : i32 to vector<16x1xi32>
    %129 = arith.cmpi sgt, %0, %128 : vector<16x1xi32>
    %130 = vector.shape_cast %129 : vector<16x1xi1> to vector<16x1xi1>
    %131 = vector.broadcast %130 : vector<16x1xi1> to vector<16x32xi1>
    %132 = arith.select %131, %127, %103 : vector<16x32xi1>, vector<16x32xf32>
    %133 = vector.shape_cast %129 : vector<16x1xi1> to vector<16x1xi1>
    %134 = vector.broadcast %133 : vector<16x1xi1> to vector<16x32xi1>
    %135 = arith.select %134, %125, %106 : vector<16x32xi1>, vector<16x32xf32>
    %136 = vector.extract_strided_slice %17 {offsets = [4, 0, 0], sizes = [1, 16, 128], strides = [1, 1, 1]} : vector<8x16x128xf32> to vector<1x16x128xf32>
    %137 = vector.shape_cast %136 : vector<1x16x128xf32> to vector<16x128xf32>
    %138 = arith.truncf %132 : vector<16x32xf32> to vector<16x32xbf16>
    %cst_19 = arith.constant dense<0.000000e+00> : vector<16x128xf32>
    %139 = tpu.matmul %138, %2, %cst_19 {dimension_numbers = #tpu.dot_dimension_numbers<[1], [0], [0], [1], [0, 0, 1, 1], [], []>} : vector<16x32xbf16>, vector<32x128xbf16>, vector<16x128xf32> -> vector<16x128xf32>
    %140 = arith.addf %137, %139 : vector<16x128xf32>
    %141 = vector.extract_strided_slice %140 {offsets = [0, 0], sizes = [16, 96], strides = [1, 1]} : vector<16x128xf32> to vector<16x96xf32>
    %142 = arith.negf %141 : vector<16x96xf32>
    %143 = math.exp %142 : vector<16x96xf32>
    %cst_20 = arith.constant 1.000000e+00 : f32
    %144 = vector.broadcast %cst_20 : f32 to vector<16x96xf32>
    %145 = arith.addf %144, %143 : vector<16x96xf32>
    %146 = arith.divf %144, %145 : vector<16x96xf32>
    %147 = vector.extract_strided_slice %140 {offsets = [0, 96], sizes = [16, 32], strides = [1, 1]} : vector<16x128xf32> to vector<16x32xf32>
    %148 = math.tanh %147 : vector<16x32xf32>
    %149 = vector.extract_strided_slice %146 {offsets = [0, 0], sizes = [16, 32], strides = [1, 1]} : vector<16x96xf32> to vector<16x32xf32>
    %150 = vector.extract_strided_slice %146 {offsets = [0, 32], sizes = [16, 32], strides = [1, 1]} : vector<16x96xf32> to vector<16x32xf32>
    %151 = vector.extract_strided_slice %146 {offsets = [0, 64], sizes = [16, 32], strides = [1, 1]} : vector<16x96xf32> to vector<16x32xf32>
    %152 = arith.mulf %150, %135 : vector<16x32xf32>
    %153 = arith.mulf %149, %148 : vector<16x32xf32>
    %154 = arith.addf %152, %153 : vector<16x32xf32>
    %155 = math.tanh %154 : vector<16x32xf32>
    %156 = arith.mulf %151, %155 : vector<16x32xf32>
    %c4_i32 = arith.constant 4 : i32
    %157 = vector.broadcast %c4_i32 : i32 to vector<16x1xi32>
    %158 = arith.cmpi sgt, %0, %157 : vector<16x1xi32>
    %159 = vector.shape_cast %158 : vector<16x1xi1> to vector<16x1xi1>
    %160 = vector.broadcast %159 : vector<16x1xi1> to vector<16x32xi1>
    %161 = arith.select %160, %156, %132 : vector<16x32xi1>, vector<16x32xf32>
    %162 = vector.shape_cast %158 : vector<16x1xi1> to vector<16x1xi1>
    %163 = vector.broadcast %162 : vector<16x1xi1> to vector<16x32xi1>
    %164 = arith.select %163, %154, %135 : vector<16x32xi1>, vector<16x32xf32>
    %165 = vector.extract_strided_slice %17 {offsets = [5, 0, 0], sizes = [1, 16, 128], strides = [1, 1, 1]} : vector<8x16x128xf32> to vector<1x16x128xf32>
    %166 = vector.shape_cast %165 : vector<1x16x128xf32> to vector<16x128xf32>
    %167 = arith.truncf %161 : vector<16x32xf32> to vector<16x32xbf16>
    %cst_21 = arith.constant dense<0.000000e+00> : vector<16x128xf32>
    %168 = tpu.matmul %167, %2, %cst_21 {dimension_numbers = #tpu.dot_dimension_numbers<[1], [0], [0], [1], [0, 0, 1, 1], [], []>} : vector<16x32xbf16>, vector<32x128xbf16>, vector<16x128xf32> -> vector<16x128xf32>
    %169 = arith.addf %166, %168 : vector<16x128xf32>
    %170 = vector.extract_strided_slice %169 {offsets = [0, 0], sizes = [16, 96], strides = [1, 1]} : vector<16x128xf32> to vector<16x96xf32>
    %171 = arith.negf %170 : vector<16x96xf32>
    %172 = math.exp %171 : vector<16x96xf32>
    %cst_22 = arith.constant 1.000000e+00 : f32
    %173 = vector.broadcast %cst_22 : f32 to vector<16x96xf32>
    %174 = arith.addf %173, %172 : vector<16x96xf32>
    %175 = arith.divf %173, %174 : vector<16x96xf32>
    %176 = vector.extract_strided_slice %169 {offsets = [0, 96], sizes = [16, 32], strides = [1, 1]} : vector<16x128xf32> to vector<16x32xf32>
    %177 = math.tanh %176 : vector<16x32xf32>
    %178 = vector.extract_strided_slice %175 {offsets = [0, 0], sizes = [16, 32], strides = [1, 1]} : vector<16x96xf32> to vector<16x32xf32>
    %179 = vector.extract_strided_slice %175 {offsets = [0, 32], sizes = [16, 32], strides = [1, 1]} : vector<16x96xf32> to vector<16x32xf32>
    %180 = vector.extract_strided_slice %175 {offsets = [0, 64], sizes = [16, 32], strides = [1, 1]} : vector<16x96xf32> to vector<16x32xf32>
    %181 = arith.mulf %179, %164 : vector<16x32xf32>
    %182 = arith.mulf %178, %177 : vector<16x32xf32>
    %183 = arith.addf %181, %182 : vector<16x32xf32>
    %184 = math.tanh %183 : vector<16x32xf32>
    %185 = arith.mulf %180, %184 : vector<16x32xf32>
    %c5_i32 = arith.constant 5 : i32
    %186 = vector.broadcast %c5_i32 : i32 to vector<16x1xi32>
    %187 = arith.cmpi sgt, %0, %186 : vector<16x1xi32>
    %188 = vector.shape_cast %187 : vector<16x1xi1> to vector<16x1xi1>
    %189 = vector.broadcast %188 : vector<16x1xi1> to vector<16x32xi1>
    %190 = arith.select %189, %185, %161 : vector<16x32xi1>, vector<16x32xf32>
    %191 = vector.shape_cast %187 : vector<16x1xi1> to vector<16x1xi1>
    %192 = vector.broadcast %191 : vector<16x1xi1> to vector<16x32xi1>
    %193 = arith.select %192, %183, %164 : vector<16x32xi1>, vector<16x32xf32>
    %194 = vector.extract_strided_slice %17 {offsets = [6, 0, 0], sizes = [1, 16, 128], strides = [1, 1, 1]} : vector<8x16x128xf32> to vector<1x16x128xf32>
    %195 = vector.shape_cast %194 : vector<1x16x128xf32> to vector<16x128xf32>
    %196 = arith.truncf %190 : vector<16x32xf32> to vector<16x32xbf16>
    %cst_23 = arith.constant dense<0.000000e+00> : vector<16x128xf32>
    %197 = tpu.matmul %196, %2, %cst_23 {dimension_numbers = #tpu.dot_dimension_numbers<[1], [0], [0], [1], [0, 0, 1, 1], [], []>} : vector<16x32xbf16>, vector<32x128xbf16>, vector<16x128xf32> -> vector<16x128xf32>
    %198 = arith.addf %195, %197 : vector<16x128xf32>
    %199 = vector.extract_strided_slice %198 {offsets = [0, 0], sizes = [16, 96], strides = [1, 1]} : vector<16x128xf32> to vector<16x96xf32>
    %200 = arith.negf %199 : vector<16x96xf32>
    %201 = math.exp %200 : vector<16x96xf32>
    %cst_24 = arith.constant 1.000000e+00 : f32
    %202 = vector.broadcast %cst_24 : f32 to vector<16x96xf32>
    %203 = arith.addf %202, %201 : vector<16x96xf32>
    %204 = arith.divf %202, %203 : vector<16x96xf32>
    %205 = vector.extract_strided_slice %198 {offsets = [0, 96], sizes = [16, 32], strides = [1, 1]} : vector<16x128xf32> to vector<16x32xf32>
    %206 = math.tanh %205 : vector<16x32xf32>
    %207 = vector.extract_strided_slice %204 {offsets = [0, 0], sizes = [16, 32], strides = [1, 1]} : vector<16x96xf32> to vector<16x32xf32>
    %208 = vector.extract_strided_slice %204 {offsets = [0, 32], sizes = [16, 32], strides = [1, 1]} : vector<16x96xf32> to vector<16x32xf32>
    %209 = vector.extract_strided_slice %204 {offsets = [0, 64], sizes = [16, 32], strides = [1, 1]} : vector<16x96xf32> to vector<16x32xf32>
    %210 = arith.mulf %208, %193 : vector<16x32xf32>
    %211 = arith.mulf %207, %206 : vector<16x32xf32>
    %212 = arith.addf %210, %211 : vector<16x32xf32>
    %213 = math.tanh %212 : vector<16x32xf32>
    %214 = arith.mulf %209, %213 : vector<16x32xf32>
    %c6_i32 = arith.constant 6 : i32
    %215 = vector.broadcast %c6_i32 : i32 to vector<16x1xi32>
    %216 = arith.cmpi sgt, %0, %215 : vector<16x1xi32>
    %217 = vector.shape_cast %216 : vector<16x1xi1> to vector<16x1xi1>
    %218 = vector.broadcast %217 : vector<16x1xi1> to vector<16x32xi1>
    %219 = arith.select %218, %214, %190 : vector<16x32xi1>, vector<16x32xf32>
    %220 = vector.shape_cast %216 : vector<16x1xi1> to vector<16x1xi1>
    %221 = vector.broadcast %220 : vector<16x1xi1> to vector<16x32xi1>
    %222 = arith.select %221, %212, %193 : vector<16x32xi1>, vector<16x32xf32>
    %223 = vector.extract_strided_slice %17 {offsets = [7, 0, 0], sizes = [1, 16, 128], strides = [1, 1, 1]} : vector<8x16x128xf32> to vector<1x16x128xf32>
    %224 = vector.shape_cast %223 : vector<1x16x128xf32> to vector<16x128xf32>
    %225 = arith.truncf %219 : vector<16x32xf32> to vector<16x32xbf16>
    %cst_25 = arith.constant dense<0.000000e+00> : vector<16x128xf32>
    %226 = tpu.matmul %225, %2, %cst_25 {dimension_numbers = #tpu.dot_dimension_numbers<[1], [0], [0], [1], [0, 0, 1, 1], [], []>} : vector<16x32xbf16>, vector<32x128xbf16>, vector<16x128xf32> -> vector<16x128xf32>
    %227 = arith.addf %224, %226 : vector<16x128xf32>
    %228 = vector.extract_strided_slice %227 {offsets = [0, 0], sizes = [16, 96], strides = [1, 1]} : vector<16x128xf32> to vector<16x96xf32>
    %229 = arith.negf %228 : vector<16x96xf32>
    %230 = math.exp %229 : vector<16x96xf32>
    %cst_26 = arith.constant 1.000000e+00 : f32
    %231 = vector.broadcast %cst_26 : f32 to vector<16x96xf32>
    %232 = arith.addf %231, %230 : vector<16x96xf32>
    %233 = arith.divf %231, %232 : vector<16x96xf32>
    %234 = vector.extract_strided_slice %227 {offsets = [0, 96], sizes = [16, 32], strides = [1, 1]} : vector<16x128xf32> to vector<16x32xf32>
    %235 = math.tanh %234 : vector<16x32xf32>
    %236 = vector.extract_strided_slice %233 {offsets = [0, 0], sizes = [16, 32], strides = [1, 1]} : vector<16x96xf32> to vector<16x32xf32>
    %237 = vector.extract_strided_slice %233 {offsets = [0, 32], sizes = [16, 32], strides = [1, 1]} : vector<16x96xf32> to vector<16x32xf32>
    %238 = vector.extract_strided_slice %233 {offsets = [0, 64], sizes = [16, 32], strides = [1, 1]} : vector<16x96xf32> to vector<16x32xf32>
    %239 = arith.mulf %237, %222 : vector<16x32xf32>
    %240 = arith.mulf %236, %235 : vector<16x32xf32>
    %241 = arith.addf %239, %240 : vector<16x32xf32>
    %242 = math.tanh %241 : vector<16x32xf32>
    %243 = arith.mulf %238, %242 : vector<16x32xf32>
    %c7_i32 = arith.constant 7 : i32
    %244 = vector.broadcast %c7_i32 : i32 to vector<16x1xi32>
    %245 = arith.cmpi sgt, %0, %244 : vector<16x1xi32>
    %246 = vector.shape_cast %245 : vector<16x1xi1> to vector<16x1xi1>
    %247 = vector.broadcast %246 : vector<16x1xi1> to vector<16x32xi1>
    %248 = arith.select %247, %243, %219 : vector<16x32xi1>, vector<16x32xf32>
    %c0_27 = arith.constant 0 : index
    %c0_28 = arith.constant 0 : index
    %249 = vector.load %arg4[%c0_27, %c0_28] : memref<16x96xf32, #tpu.memory_space<vmem>>, vector<16x96xf32>
    %250 = tpu.concatenate %249, %248 in 1 : vector<16x96xf32>, vector<16x32xf32> -> vector<16x128xf32>
    %c0_29 = arith.constant 0 : index
    %251 = memref.load %arg1[%c0_29] : memref<1xi32, #tpu.memory_space<smem>>
    %c16_i32 = arith.constant 16 : i32
    %252 = arith.muli %arg0, %c16_i32 : i32
    %253 = tpu.iota {dimensions = array<i32: 0>} : vector<16x128xi32>
    %254 = vector.broadcast %252 : i32 to vector<16x128xi32>
    %255 = arith.addi %253, %254 : vector<16x128xi32>
    %256 = tpu.iota {dimensions = array<i32: 1>} : vector<16x128xi32>
    %c-1640531535_i32 = arith.constant -1640531535 : i32
    %257 = vector.broadcast %c-1640531535_i32 : i32 to vector<16x128xi32>
    %258 = arith.muli %255, %257 : vector<16x128xi32>
    %c-2048144777_i32 = arith.constant -2048144777 : i32
    %259 = vector.broadcast %c-2048144777_i32 : i32 to vector<16x128xi32>
    %260 = arith.muli %256, %259 : vector<16x128xi32>
    %261 = arith.xori %258, %260 : vector<16x128xi32>
    %262 = vector.broadcast %251 : i32 to vector<16x128xi32>
    %263 = arith.xori %261, %262 : vector<16x128xi32>
    %c16_i32_30 = arith.constant 16 : i32
    %264 = vector.broadcast %c16_i32_30 : i32 to vector<16x128xi32>
    %265 = arith.shrui %263, %264 : vector<16x128xi32>
    %266 = arith.xori %263, %265 : vector<16x128xi32>
    %c2146121005_i32 = arith.constant 2146121005 : i32
    %267 = vector.broadcast %c2146121005_i32 : i32 to vector<16x128xi32>
    %268 = arith.muli %266, %267 : vector<16x128xi32>
    %c15_i32 = arith.constant 15 : i32
    %269 = vector.broadcast %c15_i32 : i32 to vector<16x128xi32>
    %270 = arith.shrui %268, %269 : vector<16x128xi32>
    %271 = arith.xori %268, %270 : vector<16x128xi32>
    %c-2073254261_i32 = arith.constant -2073254261 : i32
    %272 = vector.broadcast %c-2073254261_i32 : i32 to vector<16x128xi32>
    %273 = arith.muli %271, %272 : vector<16x128xi32>
    %c16_i32_31 = arith.constant 16 : i32
    %274 = vector.broadcast %c16_i32_31 : i32 to vector<16x128xi32>
    %275 = arith.shrui %273, %274 : vector<16x128xi32>
    %276 = arith.xori %273, %275 : vector<16x128xi32>
    %c2147483647_i32 = arith.constant 2147483647 : i32
    %277 = vector.broadcast %c2147483647_i32 : i32 to vector<16x128xi32>
    %278 = arith.andi %276, %277 : vector<16x128xi32>
    %279 = tpu.bitcast %278 : vector<16x128xi32> -> vector<16x128xi32>
    %c1073741824_i32 = arith.constant 1073741824 : i32
    %280 = vector.broadcast %c1073741824_i32 : i32 to vector<16x128xi32>
    %281 = arith.cmpi sge, %279, %280 : vector<16x128xi32>
    %282 = arith.extui %281 : vector<16x128xi1> to vector<16x128xi32>
    %283 = arith.sitofp %282 : vector<16x128xi32> to vector<16x128xf32>
    %284 = arith.mulf %250, %283 : vector<16x128xf32>
    %cst_32 = arith.constant 2.000000e+00 : f32
    %285 = vector.broadcast %cst_32 : f32 to vector<16x128xf32>
    %286 = arith.mulf %284, %285 : vector<16x128xf32>
    %c0_33 = arith.constant 0 : index
    %c0_34 = arith.constant 0 : index
    %287 = vector.load %arg8[%c0_33, %c0_34] : memref<16x128xf32, #tpu.memory_space<vmem>>, vector<16x128xf32>
    tpu.vector_store %arg8[%c0_33, %c0_34], %286 {strides = array<i32>} : memref<16x128xf32, #tpu.memory_space<vmem>>, vector<16x128xf32>,
    return
  }
  func.func @transform_0(%arg0: i32, %arg1: memref<1xi32, #tpu.memory_space<smem>>) -> (i32, i32) {
    %c0_i32 = arith.constant 0 : i32
    %c0_i32_0 = arith.constant 0 : i32
    return %arg0, %c0_i32 : i32, i32
  }
  func.func @transform_1(%arg0: i32, %arg1: memref<1xi32, #tpu.memory_space<smem>>) -> (i32, i32) {
    %c0_i32 = arith.constant 0 : i32
    %c0_i32_0 = arith.constant 0 : i32
    return %arg0, %c0_i32 : i32, i32
  }
  func.func @transform_2(%arg0: i32, %arg1: memref<1xi32, #tpu.memory_space<smem>>) -> (i32, i32) {
    %c0_i32 = arith.constant 0 : i32
    %c0_i32_0 = arith.constant 0 : i32
    return %arg0, %c0_i32 : i32, i32
  }
  func.func @transform_3(%arg0: i32, %arg1: memref<1xi32, #tpu.memory_space<smem>>) -> (i32, i32) {
    %c0_i32 = arith.constant 0 : i32
    %c0_i32_0 = arith.constant 0 : i32
    %c0_i32_1 = arith.constant 0 : i32
    return %c0_i32, %c0_i32_0 : i32, i32
  }
  func.func @transform_4(%arg0: i32, %arg1: memref<1xi32, #tpu.memory_space<smem>>) -> (i32, i32) {
    %c0_i32 = arith.constant 0 : i32
    %c0_i32_0 = arith.constant 0 : i32
    %c0_i32_1 = arith.constant 0 : i32
    return %c0_i32, %c0_i32_0 : i32, i32
  }
  func.func @transform_5(%arg0: i32, %arg1: memref<1xi32, #tpu.memory_space<smem>>) -> (i32, i32) {
    %c0_i32 = arith.constant 0 : i32
    %c0_i32_0 = arith.constant 0 : i32
    %c0_i32_1 = arith.constant 0 : i32
    return %c0_i32, %c0_i32_0 : i32, i32
  }
  func.func @transform_6(%arg0: i32, %arg1: memref<1xi32, #tpu.memory_space<smem>>) -> (i32, i32) {
    %c0_i32 = arith.constant 0 : i32
    %c0_i32_0 = arith.constant 0 : i32
    return %arg0, %c0_i32 : i32, i32
  }
}

</mosaic_0001>

<llo_original>
// kernel: tpu_custom_call.1
$region0: #{tpu_custom_call.1}
  #allocation0 [shape = 'u32[]', space=smem, size = 0x4, offset = 0x4, fixed_abs, tag = 'smem constant byte address 0x4 - core index']
  #allocation1 [shape = 'u32[144,128]{1,0:T(1,128)}', space=vmem, size = 0x12000, scoped, tag = 'internal scratch']
  #allocation2 [shape = 's32[1]{0}', space=sflag, size = 0x4, scoped, tag = 'scoped memory for tpu_custom_call.1']
  #allocation3 [shape = 's32[1]{0:T(128)S(6)}', space=smem, size = 0x200, scoped, tag = 'prefetched SMEM operand 0']
  %s0 = inlined_call_operand.<no memory space> [shape: s32[1], index: 0, kind: input, shape index: {}]
  %s1 = inlined_call_operand.vmem [shape: s32[32,1], index: 1, kind: input, shape index: {}]
  %s2 = inlined_call_operand.vmem [shape: s32[32,8], index: 2, kind: input, shape index: {}]
  %s3 = inlined_call_operand.vmem [shape: f32[32,96], index: 3, kind: input, shape index: {}]
  %s4 = inlined_call_operand.vmem [shape: bf16[20,128], index: 4, kind: input, shape index: {}]
  %s5 = inlined_call_operand.vmem [shape: bf16[32,128], index: 5, kind: input, shape index: {}]
  %s6 = inlined_call_operand.vmem [shape: f32[1,128], index: 6, kind: input, shape index: {}]
  %s7 = inlined_call_operand.hbm [shape: f32[32,128], index: 7, kind: output, shape index: {}]
  %s8 = sld [smem:[#allocation0]]
  $region57: #{tpu_custom_call.1} parent=0
    _
  %s10 = ssub.s32 1, %s8
  %s11 = scalar_select 0, %s10, %s8
  %12 = sst [smem:[#allocation3]] %s0
  $region1: #{tpu_custom_call.1} parent=0
    #allocation4 [shape = 'u8[16384]{0}', space=vmem, size = 0x4000, scoped, tag = 'output window, operand 0']
    #allocation5 [shape = 's32[2]{0}', space=sflag, size = 0x8, scoped, tag = 'scoped memory for tpu_custom_call.1']
    %13 = vsyncpa [#allocation5], 0
    %s14 = scalar_lea.sflag [#allocation5], 1
    %15 = vsyncpa %s14, 0
    loop: start=0, step=1, limit=4
    $region2: #{tpu_custom_call.1} parent=1 // loop_pre_header
      _
    $region3: #{tpu_custom_call.1} parent=1 // loop_header
      %s17 = sphi 0, %s21
      %p18 = scmp.ge.s32.totalorder %s17, 4
      %s27 = sphi 0, %s29
      %s30 = sphi 0, %s27
      %s31 = sphi 0, %s30
      %s47 = sphi 0, %s31
      %s53 = sphi 0, %s55
      %s56 = sphi 0, %s53
      %s57 = sphi 0, %s56
      %s73 = sphi 0, %s57
      %s79 = sphi 0, %s81
      %s82 = sphi 0, %s79
      %s83 = sphi 0, %s82
      %s99 = sphi 0, %s83
      %s103 = sphi 0, %s103
      %s105 = sphi 0, %s103
      %s106 = sphi 0, %s105
      %s120 = sphi 0, %s106
      %s124 = sphi 0, %s124
      %s126 = sphi 0, %s124
      %s127 = sphi 0, %s126
      %s141 = sphi 0, %s127
      %s145 = sphi 0, %s145
      %s147 = sphi 0, %s145
      %s148 = sphi 0, %s147
      %s162 = sphi 0, %s148
      %s168 = sphi 0, %s170
      %s171 = sphi 0, %s168
      %s172 = sphi 0, %s171
      %s188 = sphi 0, %s172
    $region4: #{tpu_custom_call.1} parent=1 // loop_header_branch
      %20 = sbr.rel (%p18) target = $region8
    $region5: #{tpu_custom_call.1} parent=1 // loop_body
      %s22 = ssub.s32 %s17, 1
      %s23 = ssub.s32 %s17, 2
      %s24 = sadd.s32 %s17, 1
      %s25 = ssub.s32 %s17, %s24
      %p26 = scmp.eq.s32.totalorder %s25, 0
      %s28 = sadd.s32 %s27, 1
      %s29 = scalar_select %p26, %s27, %s28
      %p32 = pneg %p26
      %p33 = scmp.eq.s32.totalorder %s17, 1
      %p34 = por %p32, %p33
      %p35 = scmp.ne.s32.totalorder %s27, %s30
      %p36 = scmp.eq.s32.totalorder %s17, 0
      %p37 = por %p35, %p36
      %p38 = scmp.ne.s32.totalorder %s27, %s30
      %p39 = scmp.eq.s32.totalorder %s22, 1
      %p40 = por %p38, %p39
      %p41 = scmp.ne.s32.totalorder %s30, %s31
      %p42 = scmp.eq.s32.totalorder %s22, 0
      %p43 = por %p41, %p42
      %p44 = scmp.ne.s32.totalorder %s30, %s31
      %p45 = scmp.eq.s32.totalorder %s23, 1
      %p46 = por %p44, %p45
      %p48 = scmp.ne.s32.totalorder %s31, %s47
      %p49 = scmp.eq.s32.totalorder %s23, 0
      %p50 = por %p48, %p49
      %s51 = ssub.s32 %s17, %s24
      %p52 = scmp.eq.s32.totalorder %s51, 0
      %s54 = sadd.s32 %s53, 1
      %s55 = scalar_select %p52, %s53, %s54
      %p58 = pneg %p52
      %p59 = scmp.eq.s32.totalorder %s17, 1
      %p60 = por %p58, %p59
      %p61 = scmp.ne.s32.totalorder %s53, %s56
      %p62 = scmp.eq.s32.totalorder %s17, 0
      %p63 = por %p61, %p62
      %p64 = scmp.ne.s32.totalorder %s53, %s56
      %p65 = scmp.eq.s32.totalorder %s22, 1
      %p66 = por %p64, %p65
      %p67 = scmp.ne.s32.totalorder %s56, %s57
      %p68 = scmp.eq.s32.totalorder %s22, 0
      %p69 = por %p67, %p68
      %p70 = scmp.ne.s32.totalorder %s56, %s57
      %p71 = scmp.eq.s32.totalorder %s23, 1
      %p72 = por %p70, %p71
      %p74 = scmp.ne.s32.totalorder %s57, %s73
      %p75 = scmp.eq.s32.totalorder %s23, 0
      %p76 = por %p74, %p75
      %s77 = ssub.s32 %s17, %s24
      %p78 = scmp.eq.s32.totalorder %s77, 0
      %s80 = sadd.s32 %s79, 1
      %s81 = scalar_select %p78, %s79, %s80
      %p84 = pneg %p78
      %p85 = scmp.eq.s32.totalorder %s17, 1
      %p86 = por %p84, %p85
      %p87 = scmp.ne.s32.totalorder %s79, %s82
      %p88 = scmp.eq.s32.totalorder %s17, 0
      %p89 = por %p87, %p88
      %p90 = scmp.ne.s32.totalorder %s79, %s82
      %p91 = scmp.eq.s32.totalorder %s22, 1
      %p92 = por %p90, %p91
      %p93 = scmp.ne.s32.totalorder %s82, %s83
      %p94 = scmp.eq.s32.totalorder %s22, 0
      %p95 = por %p93, %p94
      %p96 = scmp.ne.s32.totalorder %s82, %s83
      %p97 = scmp.eq.s32.totalorder %s23, 1
      %p98 = por %p96, %p97
      %p100 = scmp.ne.s32.totalorder %s83, %s99
      %p101 = scmp.eq.s32.totalorder %s23, 0
      %p102 = por %p100, %p101
      %s104 = sadd.s32 %s103, 1
      %p107 = scmp.eq.s32.totalorder %s17, 1
      %p108 = scmp.ne.s32.totalorder %s103, %s105
      %p109 = scmp.eq.s32.totalorder %s17, 0
      %p110 = por %p108, %p109
      %p111 = scmp.ne.s32.totalorder %s103, %s105
      %p112 = scmp.eq.s32.totalorder %s22, 1
      %p113 = por %p111, %p112
      %p114 = scmp.ne.s32.totalorder %s105, %s106
      %p115 = scmp.eq.s32.totalorder %s22, 0
      %p116 = por %p114, %p115
      %p117 = scmp.ne.s32.totalorder %s105, %s106
      %p118 = scmp.eq.s32.totalorder %s23, 1
      %p119 = por %p117, %p118
      %p121 = scmp.ne.s32.totalorder %s106, %s120
      %p122 = scmp.eq.s32.totalorder %s23, 0
      %p123 = por %p121, %p122
      %s125 = sadd.s32 %s124, 1
      %p128 = scmp.eq.s32.totalorder %s17, 1
      %p129 = scmp.ne.s32.totalorder %s124, %s126
      %p130 = scmp.eq.s32.totalorder %s17, 0
      %p131 = por %p129, %p130
      %p132 = scmp.ne.s32.totalorder %s124, %s126
      %p133 = scmp.eq.s32.totalorder %s22, 1
      %p134 = por %p132, %p133
      %p135 = scmp.ne.s32.totalorder %s126, %s127
      %p136 = scmp.eq.s32.totalorder %s22, 0
      %p137 = por %p135, %p136
      %p138 = scmp.ne.s32.totalorder %s126, %s127
      %p139 = scmp.eq.s32.totalorder %s23, 1
      %p140 = por %p138, %p139
      %p142 = scmp.ne.s32.totalorder %s127, %s141
      %p143 = scmp.eq.s32.totalorder %s23, 0
      %p144 = por %p142, %p143
      %s146 = sadd.s32 %s145, 1
      %p149 = scmp.eq.s32.totalorder %s17, 1
      %p150 = scmp.ne.s32.totalorder %s145, %s147
      %p151 = scmp.eq.s32.totalorder %s17, 0
      %p152 = por %p150, %p151
      %p153 = scmp.ne.s32.totalorder %s145, %s147
      %p154 = scmp.eq.s32.totalorder %s22, 1
      %p155 = por %p153, %p154
      %p156 = scmp.ne.s32.totalorder %s147, %s148
      %p157 = scmp.eq.s32.totalorder %s22, 0
      %p158 = por %p156, %p157
      %p159 = scmp.ne.s32.totalorder %s147, %s148
      %p160 = scmp.eq.s32.totalorder %s23, 1
      %p161 = por %p159, %p160
      %p163 = scmp.ne.s32.totalorder %s148, %s162
      %p164 = scmp.eq.s32.totalorder %s23, 0
      %p165 = por %p163, %p164
      %s166 = ssub.s32 %s17, %s24
      %p167 = scmp.eq.s32.totalorder %s166, 0
      %s169 = sadd.s32 %s168, 1
      %s170 = scalar_select %p167, %s168, %s169
      %p173 = pneg %p167
      %p174 = scmp.eq.s32.totalorder %s17, 1
      %p175 = por %p173, %p174
      %p176 = scmp.ne.s32.totalorder %s168, %s171
      %p177 = scmp.eq.s32.totalorder %s17, 0
      %p178 = por %p176, %p177
      %p179 = scmp.ne.s32.totalorder %s168, %s171
      %p180 = scmp.eq.s32.totalorder %s22, 1
      %p181 = por %p179, %p180
      %p182 = scmp.ne.s32.totalorder %s171, %s172
      %p183 = scmp.eq.s32.totalorder %s22, 0
      %p184 = por %p182, %p183
      %p185 = scmp.ne.s32.totalorder %s171, %s172
      %p186 = scmp.eq.s32.totalorder %s23, 1
      %p187 = por %p185, %p186
      %p189 = scmp.ne.s32.totalorder %s172, %s188
      %p190 = scmp.eq.s32.totalorder %s23, 0
      %p191 = por %p189, %p190
      %p192 = scmp.le.s32.totalorder 1, %s17
      %p193 = scmp.lt.s32.totalorder %s17, 3
      %p194 = pnand %p192, %p193
      %p195 = pneg %p194
      // Predicated region
      $region9: #{tpu_custom_call.1} parent=5 // pred_check
        _
      $region10: #{tpu_custom_call.1} parent=5 // pred_check_branch
        %197 = sbr.rel (%p194) target = $region12
      $region11: #{tpu_custom_call.1} parent=5 // pred_region
        %s198 = ssub.s32 %s17, 1
        // Predicated region
        $region13: #{tpu_custom_call.1} parent=11 // pred_check
          %p199 = pneg %p116
        $region14: #{tpu_custom_call.1} parent=11 // pred_check_branch
          %201 = sbr.rel (%p199) target = $region16
        $region15: #{tpu_custom_call.1} parent=11 // pred_region
          _
        $region16: #{tpu_custom_call.1} parent=11 // pred_fallthru
          _
        // Predicated region
        $region17: #{tpu_custom_call.1} parent=11 // pred_check
          %p202 = pneg %p137
        $region18: #{tpu_custom_call.1} parent=11 // pred_check_branch
          %204 = sbr.rel (%p202) target = $region20
        $region19: #{tpu_custom_call.1} parent=11 // pred_region
          _
        $region20: #{tpu_custom_call.1} parent=11 // pred_fallthru
          _
        // Predicated region
        $region21: #{tpu_custom_call.1} parent=11 // pred_check
          %p205 = pneg %p158
        $region22: #{tpu_custom_call.1} parent=11 // pred_check_branch
          %207 = sbr.rel (%p205) target = $region24
        $region23: #{tpu_custom_call.1} parent=11 // pred_region
          _
        $region24: #{tpu_custom_call.1} parent=11 // pred_fallthru
          _
      $region12: #{tpu_custom_call.1} parent=5 // pred_fallthru
        _
      %p208 = scmp.lt.s32.totalorder %s17, 2
      // Predicated region
      $region25: #{tpu_custom_call.1} parent=5 // pred_check
        %p209 = pneg %p208
      $region26: #{tpu_custom_call.1} parent=5 // pred_check_branch
        %211 = sbr.rel (%p209) target = $region28
      $region27: #{tpu_custom_call.1} parent=5 // pred_region
        // Predicated region
        $region29: #{tpu_custom_call.1} parent=27 // pred_check
          %p212 = pneg %p37
        $region30: #{tpu_custom_call.1} parent=27 // pred_check_branch
          %214 = sbr.rel (%p212) target = $region32
        $region31: #{tpu_custom_call.1} parent=27 // pred_region
          %s215 = smul.u32 2, %s17
          %p216 = scmp.lt.s32.totalorder %s215, 3
          %s217 = scalar_select %p216, %s215, 3
          %s218 = smul.addr %s217, 8
          %s219 = scalar_lea.vmem %s1, %s218
          %s220 = smul.u32 2, %s17
        $region32: #{tpu_custom_call.1} parent=27 // pred_fallthru
          _
        // Predicated region
        $region33: #{tpu_custom_call.1} parent=27 // pred_check
          %p221 = pneg %p63
        $region34: #{tpu_custom_call.1} parent=27 // pred_check_branch
          %223 = sbr.rel (%p221) target = $region36
        $region35: #{tpu_custom_call.1} parent=27 // pred_region
          %s224 = smul.u32 2, %s17
          %p225 = scmp.lt.s32.totalorder %s224, 3
          %s226 = scalar_select %p225, %s224, 3
          %s227 = smul.addr %s226, 8
          %s228 = scalar_lea.vmem %s2, %s227
          %s229 = smul.u32 2, %s17
        $region36: #{tpu_custom_call.1} parent=27 // pred_fallthru
          _
        // Predicated region
        $region37: #{tpu_custom_call.1} parent=27 // pred_check
          %p230 = pneg %p89
        $region38: #{tpu_custom_call.1} parent=27 // pred_check_branch
          %232 = sbr.rel (%p230) target = $region40
        $region39: #{tpu_custom_call.1} parent=27 // pred_region
          %s233 = smul.u32 2, %s17
          %p234 = scmp.lt.s32.totalorder %s233, 3
          %s235 = scalar_select %p234, %s233, 3
          %s236 = smul.addr %s235, 8
          %s237 = scalar_lea.vmem %s3, %s236
          %s238 = smul.u32 2, %s17
        $region40: #{tpu_custom_call.1} parent=27 // pred_fallthru
          _
      $region28: #{tpu_custom_call.1} parent=5 // pred_fallthru
        _
      %p239 = scmp.le.s32.totalorder 1, %s17
      %p240 = scmp.lt.s32.totalorder %s17, 3
      %p241 = pnand %p239, %p240
      %p242 = pneg %p241
      // Predicated region
      $region41: #{tpu_custom_call.1} parent=5 // pred_check
        _
      $region42: #{tpu_custom_call.1} parent=5 // pred_check_branch
        %244 = sbr.rel (%p241) target = $region44
      $region43: #{tpu_custom_call.1} parent=5 // pred_region
        %s245 = ssub.s32 %s17, 1
        %s246 = smul.u32 2, %s22
        %p247 = scmp.lt.s32.totalorder %s246, 3
        %s248 = scalar_select %p247, %s246, 3
        %s249 = smul.addr %s248, 8
        %s250 = scalar_lea.vmem %s1, %s249
        %p251 = pneg %p43
        %p252 = pneg %p40
        %s253 = smul.u32 2, %s22
        %p254 = scmp.lt.s32.totalorder %s253, 3
        %s255 = scalar_select %p254, %s253, 3
        %s256 = smul.addr %s255, 8
        %s257 = scalar_lea.vmem %s2, %s256
        %p258 = pneg %p69
        %p259 = pneg %p66
        %s260 = smul.u32 2, %s22
        %p261 = scmp.lt.s32.totalorder %s260, 3
        %s262 = scalar_select %p261, %s260, 3
        %s263 = smul.addr %s262, 8
        %s264 = scalar_lea.vmem %s3, %s263
        %p265 = pneg %p95
        %p266 = pneg %p92
        %p267 = pneg %p116
        %p268 = pneg %p113
        %p269 = pneg %p137
        %p270 = pneg %p134
        %p271 = pneg %p158
        %p272 = pneg %p155
        %p273 = pneg %p184
        %p274 = pneg %p181
        %s275 = sand.u32 %s171, 1
        %s276 = scalar_lea.sflag [#allocation5], %s275
        %s277 = sand.u32 %s171, 1
        %s278 = smul.addr %s277, 16
        %s279 = scalar_lea.vmem [#allocation4], %s278
        %s280 = smul.u32 2, %s22
        %p281 = scmp.lt.s32.totalorder %s280, 3
        %s282 = scalar_select %p281, %s280, 3
        %s283 = smul.addr %s282, 8
        %s284 = scalar_lea.vmem %s1, %s283
        %s285 = smul.u32 2, %s22
        %s286 = smul.u32 2, %s22
        %p287 = scmp.lt.s32.totalorder %s286, 3
        %s288 = scalar_select %p287, %s286, 3
        %s289 = smul.addr %s288, 8
        %s290 = scalar_lea.vmem %s2, %s289
        %s291 = smul.u32 2, %s22
        %s292 = smul.u32 2, %s22
        %p293 = scmp.lt.s32.totalorder %s292, 3
        %s294 = scalar_select %p293, %s292, 3
        %s295 = smul.addr %s294, 8
        %s296 = scalar_lea.vmem %s3, %s295
        %s297 = smul.u32 2, %s22
        %s298 = smul.u32 2, %s22
        %v300 = vld [vmem:[%s284] sm:$0xff]
        %v301 = vld [vmem:[%s284 + $0x8] sm:$0xff]
        %v302 = vld [vmem:[%s4] sm:$0xf]
        %v303 = vld [vmem:[%s4 + $0x4] sm:$0xf]
        %v304 = vld [vmem:[%s4 + $0x8] sm:$0x3]
        %v305 = vld [vmem:[%s5] sm:$0xf]
        %v306 = vld [vmem:[%s5 + $0x4] sm:$0xf]
        %v307 = vld [vmem:[%s5 + $0x8] sm:$0xf]
        %v308 = vld [vmem:[%s5 + $0xc] sm:$0xf]
        %v309 = vld [vmem:[%s6] sm:$0x1]
        %v310 = vld [vmem:[%s290] sm:$0xff]
        %v311 = vld [vmem:[%s290 + $0x8] sm:$0xff]
        %312 = vxpose.xlu0.b32.start [1/16] %v310, 128
        %313 = vxpose.xlu0.b32.cont [2/16] %v311, 128
        %314 = vxpose.xlu0.b32.cont [3/16] 0, 128
        %315 = vxpose.xlu0.b32.cont [4/16] 0, 128
        %316 = vxpose.xlu0.b32.cont [5/16] 0, 128
        %317 = vxpose.xlu0.b32.cont [6/16] 0, 128
        %318 = vxpose.xlu0.b32.cont [7/16] 0, 128
        %319 = vxpose.xlu0.b32.cont [8/16] 0, 128
        %320 = vxpose.xlu0.b32.cont [9/16] 0, 128
        %321 = vxpose.xlu0.b32.cont [10/16] 0, 128
        %322 = vxpose.xlu0.b32.cont [11/16] 0, 128
        %323 = vxpose.xlu0.b32.cont [12/16] 0, 128
        %324 = vxpose.xlu0.b32.cont [13/16] 0, 128
        %325 = vxpose.xlu0.b32.cont [14/16] 0, 128
        %326 = vxpose.xlu0.b32.cont [15/16] 0, 128
        %327 = vxpose.xlu0.b32.end [16/16] 0, 128
        %v328 = vpop.trf.xlu0
        %v329 = vpop.trf.xlu0
        %v330 = vpop.trf.xlu0
        %v331 = vpop.trf.xlu0
        %v332 = vpop.trf.xlu0
        %v333 = vpop.trf.xlu0
        %v334 = vpop.trf.xlu0
        %v335 = vpop.trf.xlu0
        %v336 = vpop.trf.xlu0
        %v337 = vpop.trf.xlu0
        %v338 = vpop.trf.xlu0
        %v339 = vpop.trf.xlu0
        %v340 = vpop.trf.xlu0
        %v341 = vpop.trf.xlu0
        %v342 = vpop.trf.xlu0
        %v343 = vpop.trf.xlu0
        %v344 = vlaneseq
        %v345 = vand.u32 %v344, 127
        %v346 = vlaneseq
        %v347 = vshrl.u32 %v346, 7
        %v348 = vsub.s32 0, %v347
        %v349 = vrot.slane %v328, %v348
        %351 = vbcast.lane.b32.xlu0 %v349, 256
        %v352 = vpop.permute.xlu0 %351
        %s354 = sor.u32 256, 8
        %355 = vbcast.lane.b32.xlu0 %v349, %s354
        %v356 = vpop.permute.xlu0 %355
        %v357 = vlaneseq
        %v358 = vshrl.u32 %v357, 7
        %v359 = vsub.s32 1, %v358
        %v360 = vrot.slane %v328, %v359
        %362 = vbcast.lane.b32.xlu0 %v360, 256
        %v363 = vpop.permute.xlu0 %362
        %s365 = sor.u32 256, 8
        %366 = vbcast.lane.b32.xlu0 %v360, %s365
        %v367 = vpop.permute.xlu0 %366
        %v368 = vlaneseq
        %v369 = vshrl.u32 %v368, 7
        %v370 = vsub.s32 2, %v369
        %v371 = vrot.slane %v328, %v370
        %373 = vbcast.lane.b32.xlu0 %v371, 256
        %v374 = vpop.permute.xlu0 %373
        %s376 = sor.u32 256, 8
        %377 = vbcast.lane.b32.xlu0 %v371, %s376
        %v378 = vpop.permute.xlu0 %377
        %v379 = vlaneseq
        %v380 = vshrl.u32 %v379, 7
        %v381 = vsub.s32 3, %v380
        %v382 = vrot.slane %v328, %v381
        %384 = vbcast.lane.b32.xlu0 %v382, 256
        %v385 = vpop.permute.xlu0 %384
        %s387 = sor.u32 256, 8
        %388 = vbcast.lane.b32.xlu0 %v382, %s387
        %v389 = vpop.permute.xlu0 %388
        %v390 = vlaneseq
        %v391 = vshrl.u32 %v390, 7
        %v392 = vsub.s32 4, %v391
        %v393 = vrot.slane %v328, %v392
        %395 = vbcast.lane.b32.xlu0 %v393, 256
        %v396 = vpop.permute.xlu0 %395
        %s398 = sor.u32 256, 8
        %399 = vbcast.lane.b32.xlu0 %v393, %s398
        %v400 = vpop.permute.xlu0 %399
        %v401 = vlaneseq
        %v402 = vshrl.u32 %v401, 7
        %v403 = vsub.s32 5, %v402
        %v404 = vrot.slane %v328, %v403
        %406 = vbcast.lane.b32.xlu0 %v404, 256
        %v407 = vpop.permute.xlu0 %406
        %s409 = sor.u32 256, 8
        %410 = vbcast.lane.b32.xlu0 %v404, %s409
        %v411 = vpop.permute.xlu0 %410
        %v412 = vlaneseq
        %v413 = vshrl.u32 %v412, 7
        %v414 = vsub.s32 6, %v413
        %v415 = vrot.slane %v328, %v414
        %417 = vbcast.lane.b32.xlu0 %v415, 256
        %v418 = vpop.permute.xlu0 %417
        %s420 = sor.u32 256, 8
        %421 = vbcast.lane.b32.xlu0 %v415, %s420
        %v422 = vpop.permute.xlu0 %421
        %v423 = vlaneseq
        %v424 = vshrl.u32 %v423, 7
        %v425 = vsub.s32 7, %v424
        %v426 = vrot.slane %v328, %v425
        %428 = vbcast.lane.b32.xlu0 %v426, 256
        %v429 = vpop.permute.xlu0 %428
        %s431 = sor.u32 256, 8
        %432 = vbcast.lane.b32.xlu0 %v426, %s431
        %v433 = vpop.permute.xlu0 %432
        %vm434 = vcmp.eq.s32.totalorder %v352, %v345
        %vm435 = vcmp.eq.s32.totalorder %v356, %v345
        %vm436 = vcmp.eq.s32.totalorder %v363, %v345
        %vm437 = vcmp.eq.s32.totalorder %v367, %v345
        %vm438 = vcmp.eq.s32.totalorder %v374, %v345
        %vm439 = vcmp.eq.s32.totalorder %v378, %v345
        %vm440 = vcmp.eq.s32.totalorder %v385, %v345
        %vm441 = vcmp.eq.s32.totalorder %v389, %v345
        %vm442 = vcmp.eq.s32.totalorder %v396, %v345
        %vm443 = vcmp.eq.s32.totalorder %v400, %v345
        %vm444 = vcmp.eq.s32.totalorder %v407, %v345
        %vm445 = vcmp.eq.s32.totalorder %v411, %v345
        %vm446 = vcmp.eq.s32.totalorder %v418, %v345
        %vm447 = vcmp.eq.s32.totalorder %v422, %v345
        %vm448 = vcmp.eq.s32.totalorder %v429, %v345
        %vm449 = vcmp.eq.s32.totalorder %v433, %v345
        %v450 = vsel %vm434, 1, 0
        %v451 = vsel %vm435, 1, 0
        %v452 = vsel %vm436, 1, 0
        %v453 = vsel %vm437, 1, 0
        %v454 = vsel %vm438, 1, 0
        %v455 = vsel %vm439, 1, 0
        %v456 = vsel %vm440, 1, 0
        %v457 = vsel %vm441, 1, 0
        %v458 = vsel %vm442, 1, 0
        %v459 = vsel %vm443, 1, 0
        %v460 = vsel %vm444, 1, 0
        %v461 = vsel %vm445, 1, 0
        %v462 = vsel %vm446, 1, 0
        %v463 = vsel %vm447, 1, 0
        %v464 = vsel %vm448, 1, 0
        %v465 = vsel %vm449, 1, 0
        %v466 = vcvt.s32.f32 %v450
        %v467 = vcvt.s32.f32 %v451
        %v468 = vcvt.s32.f32 %v452
        %v469 = vcvt.s32.f32 %v453
        %v470 = vcvt.s32.f32 %v454
        %v471 = vcvt.s32.f32 %v455
        %v472 = vcvt.s32.f32 %v456
        %v473 = vcvt.s32.f32 %v457
        %v474 = vcvt.s32.f32 %v458
        %v475 = vcvt.s32.f32 %v459
        %v476 = vcvt.s32.f32 %v460
        %v477 = vcvt.s32.f32 %v461
        %v478 = vcvt.s32.f32 %v462
        %v479 = vcvt.s32.f32 %v463
        %v480 = vcvt.s32.f32 %v464
        %v481 = vcvt.s32.f32 %v465
        %v482 = vpack.c.bf16 %v467, %v466
        %v483 = vpack.c.bf16 %v469, %v468
        %v484 = vpack.c.bf16 %v471, %v470
        %v485 = vpack.c.bf16 %v473, %v472
        %v486 = vpack.c.bf16 %v475, %v474
        %v487 = vpack.c.bf16 %v477, %v476
        %v488 = vpack.c.bf16 %v479, %v478
        %v489 = vpack.c.bf16 %v481, %v480
        %v491 = vlaneseq
        %v492 = vshrl.u32 %v491, 7
        %v493 = vsub.s32 0, %v492
        %v494 = vrot.slane %v309, %v493
        %v499 = vunpack.c.l.b16 %v302
        %v500 = vunpack.c.l.b16 %v303
        %v501 = vunpack.c.l.b16 %v304
        %v502 = vpack.c.b16 %v500, %v499
        %v503 = vpack.c.b16 %v501, %v501
        %vm505 = vcmask 162816
        %v507 = vsel %vm505, %v482, 0
        %v510 = vsel %vm505, %v483, 0
        %v513 = vsel %vm505, %v484, 0
        %v516 = vsel %vm505, %v485, 0
        %v519 = vsel %vm505, %v486, 0
        %v522 = vsel %vm505, %v487, 0
        %v525 = vsel %vm505, %v488, 0
        %v528 = vsel %vm505, %v489, 0
        %vm530 = vcmask 1041408
        %v532 = vsel %vm530, %v503, 0
        %534 = vmatprep.subr.bf16.mxu0 0
        %535 = vmatpush1.bf16.msra.mxu0 0
        %536 = vmatprep.subr.bf16.mxu0 0
        %537 = vmatpush1.bf16.msra.mxu0 0
        %538 = vmatprep.subr.bf16.mxu0 0
        %539 = vmatpush1.bf16.msra.mxu0 0
        %540 = vmatprep.subr.bf16.mxu0 0
        %541 = vmatpush1.bf16.msra.mxu0 0
        %542 = vmatprep.subr.bf16.mxu0 0
        %543 = vmatpush1.bf16.msra.mxu0 0
        %544 = vmatprep.subr.bf16.mxu0 0
        %545 = vmatpush1.bf16.msra.mxu0 0
        %546 = vmatprep.subr.bf16.mxu0 0
        %547 = vmatpush1.bf16.msra.mxu0 %v532
        %548 = vmatprep.subr.bf16.mxu0 0
        %549 = vmatpush1.bf16.msra.mxu0 %v502
        %550 = vmatprep.subr.bf16.mxu0 0
        %551 = vmatpush2.bf16.msra.mxu0 0
        %552 = vmatprep.subr.bf16.mxu0 0
        %553 = vmatpush2.bf16.msra.mxu0 0
        %554 = vmatprep.subr.bf16.mxu0 0
        %555 = vmatpush2.bf16.msra.mxu0 0
        %556 = vmatprep.subr.bf16.mxu0 0
        %557 = vmatpush2.bf16.msra.mxu0 0
        %558 = vmatprep.subr.bf16.mxu0 0
        %559 = vmatpush2.bf16.msra.mxu0 0
        %560 = vmatprep.subr.bf16.mxu0 0
        %561 = vmatpush2.bf16.msra.mxu0 0
        %562 = vmatprep.subr.bf16.mxu0 0
        %563 = vmatpush2.bf16.msra.mxu0 0
        %564 = vmatprep.subr.bf16.mxu0 0
        %565 = vmatpush2.bf16.msra.mxu0 0
        %566 = vmatprep.mubr.bf16.mxu0 0
        %567 = vmatmul.mubr.bf16.gmra.mxu0 %v507
        %v568 = vpop.f32.mrf.mxu0
        %v569 = vadd.f32 %v494, %v568
        %v570 = vpop.f32.mrf.mxu0
        %v571 = vpop.f32.mrf.mxu0
        %v572 = vadd.f32 %v494, %v571
        %v573 = vpop.f32.mrf.mxu0
        %574 = vmatprep.mubr.bf16.mxu0 0
        %575 = vmatmul.mubr.bf16.gmra.mxu0 %v510
        %v576 = vpop.f32.mrf.mxu0
        %v577 = vadd.f32 %v494, %v576
        %v578 = vpop.f32.mrf.mxu0
        %v579 = vpop.f32.mrf.mxu0
        %v580 = vadd.f32 %v494, %v579
        %v581 = vpop.f32.mrf.mxu0
        %582 = vmatprep.mubr.bf16.mxu0 0
        %583 = vmatmul.mubr.bf16.gmra.mxu0 %v513
        %v584 = vpop.f32.mrf.mxu0
        %v585 = vadd.f32 %v494, %v584
        %v586 = vpop.f32.mrf.mxu0
        %v587 = vpop.f32.mrf.mxu0
        %v588 = vadd.f32 %v494, %v587
        %v589 = vpop.f32.mrf.mxu0
        %590 = vmatprep.mubr.bf16.mxu0 0
        %591 = vmatmul.mubr.bf16.gmra.mxu0 %v516
        %v592 = vpop.f32.mrf.mxu0
        %v593 = vadd.f32 %v494, %v592
        %v594 = vpop.f32.mrf.mxu0
        %v595 = vpop.f32.mrf.mxu0
        %v596 = vadd.f32 %v494, %v595
        %v597 = vpop.f32.mrf.mxu0
        %598 = vmatprep.mubr.bf16.mxu0 0
        %599 = vmatmul.mubr.bf16.gmra.mxu0 %v519
        %v600 = vpop.f32.mrf.mxu0
        %v601 = vadd.f32 %v494, %v600
        %v602 = vpop.f32.mrf.mxu0
        %v603 = vpop.f32.mrf.mxu0
        %v604 = vadd.f32 %v494, %v603
        %v605 = vpop.f32.mrf.mxu0
        %606 = vmatprep.mubr.bf16.mxu0 0
        %607 = vmatmul.mubr.bf16.gmra.mxu0 %v522
        %v608 = vpop.f32.mrf.mxu0
        %v609 = vadd.f32 %v494, %v608
        %v610 = vpop.f32.mrf.mxu0
        %v611 = vpop.f32.mrf.mxu0
        %v612 = vadd.f32 %v494, %v611
        %v613 = vpop.f32.mrf.mxu0
        %614 = vmatprep.mubr.bf16.mxu0 0
        %615 = vmatmul.mubr.bf16.gmra.mxu0 %v525
        %v616 = vpop.f32.mrf.mxu0
        %v617 = vadd.f32 %v494, %v616
        %v618 = vpop.f32.mrf.mxu0
        %v619 = vpop.f32.mrf.mxu0
        %v620 = vadd.f32 %v494, %v619
        %v621 = vpop.f32.mrf.mxu0
        %622 = vmatprep.mubr.bf16.mxu0 0
        %623 = vmatmul.mubr.bf16.gmra.mxu0 %v528
        %v624 = vpop.f32.mrf.mxu0
        %v625 = vadd.f32 %v494, %v624
        %v626 = vpop.f32.mrf.mxu0
        %v627 = vpop.f32.mrf.mxu0
        %v628 = vadd.f32 %v494, %v627
        %v629 = vpop.f32.mrf.mxu0
        %630 = vdwg.mxu0
        %v635 = vunpack.c.l.b16 %v305
        %v636 = vunpack.c.l.b16 %v306
        %v637 = vunpack.c.l.b16 %v307
        %v638 = vunpack.c.l.b16 %v308
        %v639 = vpack.c.b16 %v636, %v635
        %v640 = vpack.c.b16 %v638, %v637
        %vm643 = vcmask 261120
        %v645 = vsel %vm643, 0, 0
        %647 = vmatprep.subr.bf16.mxu0 0
        %648 = vmatpush1.bf16.msra.mxu0 0
        %649 = vmatprep.subr.bf16.mxu0 0
        %650 = vmatpush1.bf16.msra.mxu0 0
        %651 = vmatprep.subr.bf16.mxu0 0
        %652 = vmatpush1.bf16.msra.mxu0 0
        %653 = vmatprep.subr.bf16.mxu0 0
        %654 = vmatpush1.bf16.msra.mxu0 0
        %655 = vmatprep.subr.bf16.mxu0 0
        %656 = vmatpush1.bf16.msra.mxu0 0
        %657 = vmatprep.subr.bf16.mxu0 0
        %658 = vmatpush1.bf16.msra.mxu0 0
        %659 = vmatprep.subr.bf16.mxu0 0
        %660 = vmatpush1.bf16.msra.mxu0 %v640
        %661 = vmatprep.subr.bf16.mxu0 0
        %662 = vmatpush1.bf16.msra.mxu0 %v639
        %663 = vmatprep.subr.bf16.mxu0 0
        %664 = vmatpush2.bf16.msra.mxu0 0
        %665 = vmatprep.subr.bf16.mxu0 0
        %666 = vmatpush2.bf16.msra.mxu0 0
        %667 = vmatprep.subr.bf16.mxu0 0
        %668 = vmatpush2.bf16.msra.mxu0 0
        %669 = vmatprep.subr.bf16.mxu0 0
        %670 = vmatpush2.bf16.msra.mxu0 0
        %671 = vmatprep.subr.bf16.mxu0 0
        %672 = vmatpush2.bf16.msra.mxu0 0
        %673 = vmatprep.subr.bf16.mxu0 0
        %674 = vmatpush2.bf16.msra.mxu0 0
        %675 = vmatprep.subr.bf16.mxu0 0
        %676 = vmatpush2.bf16.msra.mxu0 0
        %677 = vmatprep.subr.bf16.mxu0 0
        %678 = vmatpush2.bf16.msra.mxu0 0
        %679 = vmatprep.mubr.bf16.mxu0 0
        %680 = vmatmul.mubr.bf16.gmra.mxu0 %v645
        %v681 = vpop.f32.mrf.mxu0
        %v682 = vadd.f32 0.0, %v681
        %v683 = vpop.f32.mrf.mxu0
        %v684 = vpop.f32.mrf.mxu0
        %v685 = vadd.f32 0.0, %v684
        %v686 = vpop.f32.mrf.mxu0
        %687 = vdwg.mxu0
        %v688 = vadd.f32 %v569, %v682
        %v689 = vadd.f32 %v572, %v685
        %v690 = vxor.u32 %v688, 2147483648
        %v691 = vxor.u32 %v689, 2147483648
        %v692 = vmul.f32 %v690, 1.442695
        %v693 = vpow.pop %v692
        %v694 = vmul.f32 %v691, 1.442695
        %v695 = vpow.pop %v694
        %v696 = vadd.f32 %v693, 1.0
        %v697 = vadd.f32 %v695, 1.0
        %v698 = vrcp.pop %v696
        %v699 = vmul.f32 1.0, %v698
        %v700 = vrcp.pop %v697
        %v701 = vmul.f32 1.0, %v700
        %v702 = vtanh.pop %v688
        %v703 = vtanh.pop %v689
        %v704 = vmul.f32 %v699, 0.0
        %v705 = vmul.f32 %v701, 0.0
        %708 = vrot.lane.b32.xlu0 %v702, 32
        %v709 = vpop.permute.xlu0 %708
        %710 = vrot.lane.b32.xlu0 %v703, 32
        %v711 = vpop.permute.xlu0 %710
        %v714 = vmul.f32 %v699, %v709
        %v715 = vmul.f32 %v701, %v711
        %718 = vrot.lane.b32.xlu0 %v714, 32
        %v719 = vpop.permute.xlu0 %718
        %720 = vrot.lane.b32.xlu0 %v715, 32
        %v721 = vpop.permute.xlu0 %720
        %v724 = vadd.f32 %v704, %v719
        %v725 = vadd.f32 %v705, %v721
        %v726 = vtanh.pop %v724
        %v727 = vtanh.pop %v725
        %730 = vrot.lane.b32.xlu0 %v726, 32
        %v731 = vpop.permute.xlu0 %730
        %732 = vrot.lane.b32.xlu0 %v727, 32
        %v733 = vpop.permute.xlu0 %732
        %v736 = vmul.f32 %v699, %v731
        %v737 = vmul.f32 %v701, %v733
        %vm738 = vcmp.gt.s32.totalorder %v300, 0
        %vm739 = vcmp.gt.s32.totalorder %v301, 0
        %v740 = vsel %vm738, 1, 0
        %v741 = vsel %vm739, 1, 0
        %742 = vset.pattern.permute.xlu0 0
        %743 = vperm.xlu0 %742, %v740
        %v744 = vpop.permute.xlu0 %743
        %745 = vset.pattern.permute.xlu0 0
        %746 = vperm.xlu0 %745, %v741
        %v747 = vpop.permute.xlu0 %746
        %vm748 = vcmp.eq.s32.totalorder %v744, 1
        %vm749 = vcmp.eq.s32.totalorder %v747, 1
        %v750 = vsel %vm748, %v736, 0.0
        %v751 = vsel %vm749, %v737, 0.0
        %v752 = vsel %vm748, %v724, 0.0
        %v753 = vsel %vm749, %v725, 0.0
        %v754 = vpack.c.bf16 %v751, %v750
        %756 = vrot.lane.b32.xlu0 %v754, 64
        %v757 = vpop.permute.xlu0 %756
        %v759 = vsel %vm643, %v757, 0
        %761 = vmatprep.subr.bf16.mxu0 0
        %762 = vmatpush1.bf16.msra.mxu0 0
        %763 = vmatprep.subr.bf16.mxu0 0
        %764 = vmatpush1.bf16.msra.mxu0 0
        %765 = vmatprep.subr.bf16.mxu0 0
        %766 = vmatpush1.bf16.msra.mxu0 0
        %767 = vmatprep.subr.bf16.mxu0 0
        %768 = vmatpush1.bf16.msra.mxu0 0
        %769 = vmatprep.subr.bf16.mxu0 0
        %770 = vmatpush1.bf16.msra.mxu0 0
        %771 = vmatprep.subr.bf16.mxu0 0
        %772 = vmatpush1.bf16.msra.mxu0 0
        %773 = vmatprep.subr.bf16.mxu0 0
        %774 = vmatpush1.bf16.msra.mxu0 %v640
        %775 = vmatprep.subr.bf16.mxu0 0
        %776 = vmatpush1.bf16.msra.mxu0 %v639
        %777 = vmatprep.subr.bf16.mxu0 0
        %778 = vmatpush2.bf16.msra.mxu0 0
        %779 = vmatprep.subr.bf16.mxu0 0
        %780 = vmatpush2.bf16.msra.mxu0 0
        %781 = vmatprep.subr.bf16.mxu0 0
        %782 = vmatpush2.bf16.msra.mxu0 0
        %783 = vmatprep.subr.bf16.mxu0 0
        %784 = vmatpush2.bf16.msra.mxu0 0
        %785 = vmatprep.subr.bf16.mxu0 0
        %786 = vmatpush2.bf16.msra.mxu0 0
        %787 = vmatprep.subr.bf16.mxu0 0
        %788 = vmatpush2.bf16.msra.mxu0 0
        %789 = vmatprep.subr.bf16.mxu0 0
        %790 = vmatpush2.bf16.msra.mxu0 0
        %791 = vmatprep.subr.bf16.mxu0 0
        %792 = vmatpush2.bf16.msra.mxu0 0
        %793 = vmatprep.mubr.bf16.mxu0 0
        %794 = vmatmul.mubr.bf16.gmra.mxu0 %v759
        %v795 = vpop.f32.mrf.mxu0
        %v796 = vadd.f32 0.0, %v795
        %v797 = vpop.f32.mrf.mxu0
        %v798 = vpop.f32.mrf.mxu0
        %v799 = vadd.f32 0.0, %v798
        %v800 = vpop.f32.mrf.mxu0
        %801 = vdwg.mxu0
        %v802 = vadd.f32 %v577, %v796
        %v803 = vadd.f32 %v580, %v799
        %v804 = vxor.u32 %v802, 2147483648
        %v805 = vxor.u32 %v803, 2147483648
        %v806 = vmul.f32 %v804, 1.442695
        %v807 = vpow.pop %v806
        %v808 = vmul.f32 %v805, 1.442695
        %v809 = vpow.pop %v808
        %v810 = vadd.f32 %v807, 1.0
        %v811 = vadd.f32 %v809, 1.0
        %v812 = vrcp.pop %v810
        %v813 = vmul.f32 1.0, %v812
        %v814 = vrcp.pop %v811
        %v815 = vmul.f32 1.0, %v814
        %v816 = vtanh.pop %v802
        %v817 = vtanh.pop %v803
        %v818 = vmul.f32 %v813, %v752
        %v819 = vmul.f32 %v815, %v753
        %822 = vrot.lane.b32.xlu0 %v816, 32
        %v823 = vpop.permute.xlu0 %822
        %824 = vrot.lane.b32.xlu0 %v817, 32
        %v825 = vpop.permute.xlu0 %824
        %v828 = vmul.f32 %v813, %v823
        %v829 = vmul.f32 %v815, %v825
        %832 = vrot.lane.b32.xlu0 %v828, 32
        %v833 = vpop.permute.xlu0 %832
        %834 = vrot.lane.b32.xlu0 %v829, 32
        %v835 = vpop.permute.xlu0 %834
        %v838 = vadd.f32 %v818, %v833
        %v839 = vadd.f32 %v819, %v835
        %v840 = vtanh.pop %v838
        %v841 = vtanh.pop %v839
        %844 = vrot.lane.b32.xlu0 %v840, 32
        %v845 = vpop.permute.xlu0 %844
        %846 = vrot.lane.b32.xlu0 %v841, 32
        %v847 = vpop.permute.xlu0 %846
        %v850 = vmul.f32 %v813, %v845
        %v851 = vmul.f32 %v815, %v847
        %vm852 = vcmp.gt.s32.totalorder %v300, 1
        %vm853 = vcmp.gt.s32.totalorder %v301, 1
        %v854 = vsel %vm852, 1, 0
        %v855 = vsel %vm853, 1, 0
        %856 = vset.pattern.permute.xlu0 0
        %857 = vperm.xlu0 %856, %v854
        %v858 = vpop.permute.xlu0 %857
        %859 = vset.pattern.permute.xlu0 0
        %860 = vperm.xlu0 %859, %v855
        %v861 = vpop.permute.xlu0 %860
        %vm862 = vcmp.eq.s32.totalorder %v858, 1
        %vm863 = vcmp.eq.s32.totalorder %v861, 1
        %v864 = vsel %vm862, %v850, %v750
        %v865 = vsel %vm863, %v851, %v751
        %v866 = vsel %vm862, %v838, %v752
        %v867 = vsel %vm863, %v839, %v753
        %v868 = vpack.c.bf16 %v865, %v864
        %870 = vrot.lane.b32.xlu0 %v868, 64
        %v871 = vpop.permute.xlu0 %870
        %v873 = vsel %vm643, %v871, 0
        %875 = vmatprep.subr.bf16.mxu0 0
        %876 = vmatpush1.bf16.msra.mxu0 0
        %877 = vmatprep.subr.bf16.mxu0 0
        %878 = vmatpush1.bf16.msra.mxu0 0
        %879 = vmatprep.subr.bf16.mxu0 0
        %880 = vmatpush1.bf16.msra.mxu0 0
        %881 = vmatprep.subr.bf16.mxu0 0
        %882 = vmatpush1.bf16.msra.mxu0 0
        %883 = vmatprep.subr.bf16.mxu0 0
        %884 = vmatpush1.bf16.msra.mxu0 0
        %885 = vmatprep.subr.bf16.mxu0 0
        %886 = vmatpush1.bf16.msra.mxu0 0
        %887 = vmatprep.subr.bf16.mxu0 0
        %888 = vmatpush1.bf16.msra.mxu0 %v640
        %889 = vmatprep.subr.bf16.mxu0 0
        %890 = vmatpush1.bf16.msra.mxu0 %v639
        %891 = vmatprep.subr.bf16.mxu0 0
        %892 = vmatpush2.bf16.msra.mxu0 0
        %893 = vmatprep.subr.bf16.mxu0 0
        %894 = vmatpush2.bf16.msra.mxu0 0
        %895 = vmatprep.subr.bf16.mxu0 0
        %896 = vmatpush2.bf16.msra.mxu0 0
        %897 = vmatprep.subr.bf16.mxu0 0
        %898 = vmatpush2.bf16.msra.mxu0 0
        %899 = vmatprep.subr.bf16.mxu0 0
        %900 = vmatpush2.bf16.msra.mxu0 0
        %901 = vmatprep.subr.bf16.mxu0 0
        %902 = vmatpush2.bf16.msra.mxu0 0
        %903 = vmatprep.subr.bf16.mxu0 0
        %904 = vmatpush2.bf16.msra.mxu0 0
        %905 = vmatprep.subr.bf16.mxu0 0
        %906 = vmatpush2.bf16.msra.mxu0 0
        %907 = vmatprep.mubr.bf16.mxu0 0
        %908 = vmatmul.mubr.bf16.gmra.mxu0 %v873
        %v909 = vpop.f32.mrf.mxu0
        %v910 = vadd.f32 0.0, %v909
        %v911 = vpop.f32.mrf.mxu0
        %v912 = vpop.f32.mrf.mxu0
        %v913 = vadd.f32 0.0, %v912
        %v914 = vpop.f32.mrf.mxu0
        %915 = vdwg.mxu0
        %v916 = vadd.f32 %v585, %v910
        %v917 = vadd.f32 %v588, %v913
        %v918 = vxor.u32 %v916, 2147483648
        %v919 = vxor.u32 %v917, 2147483648
        %v920 = vmul.f32 %v918, 1.442695
        %v921 = vpow.pop %v920
        %v922 = vmul.f32 %v919, 1.442695
        %v923 = vpow.pop %v922
        %v924 = vadd.f32 %v921, 1.0
        %v925 = vadd.f32 %v923, 1.0
        %v926 = vrcp.pop %v924
        %v927 = vmul.f32 1.0, %v926
        %v928 = vrcp.pop %v925
        %v929 = vmul.f32 1.0, %v928
        %v930 = vtanh.pop %v916
        %v931 = vtanh.pop %v917
        %v932 = vmul.f32 %v927, %v866
        %v933 = vmul.f32 %v929, %v867
        %936 = vrot.lane.b32.xlu0 %v930, 32
        %v937 = vpop.permute.xlu0 %936
        %938 = vrot.lane.b32.xlu0 %v931, 32
        %v939 = vpop.permute.xlu0 %938
        %v942 = vmul.f32 %v927, %v937
        %v943 = vmul.f32 %v929, %v939
        %946 = vrot.lane.b32.xlu0 %v942, 32
        %v947 = vpop.permute.xlu0 %946
        %948 = vrot.lane.b32.xlu0 %v943, 32
        %v949 = vpop.permute.xlu0 %948
        %v952 = vadd.f32 %v932, %v947
        %v953 = vadd.f32 %v933, %v949
        %v954 = vtanh.pop %v952
        %v955 = vtanh.pop %v953
        %958 = vrot.lane.b32.xlu0 %v954, 32
        %v959 = vpop.permute.xlu0 %958
        %960 = vrot.lane.b32.xlu0 %v955, 32
        %v961 = vpop.permute.xlu0 %960
        %v964 = vmul.f32 %v927, %v959
        %v965 = vmul.f32 %v929, %v961
        %vm966 = vcmp.gt.s32.totalorder %v300, 2
        %vm967 = vcmp.gt.s32.totalorder %v301, 2
        %v968 = vsel %vm966, 1, 0
        %v969 = vsel %vm967, 1, 0
        %970 = vset.pattern.permute.xlu0 0
        %971 = vperm.xlu0 %970, %v968
        %v972 = vpop.permute.xlu0 %971
        %973 = vset.pattern.permute.xlu0 0
        %974 = vperm.xlu0 %973, %v969
        %v975 = vpop.permute.xlu0 %974
        %vm976 = vcmp.eq.s32.totalorder %v972, 1
        %vm977 = vcmp.eq.s32.totalorder %v975, 1
        %v978 = vsel %vm976, %v964, %v864
        %v979 = vsel %vm977, %v965, %v865
        %v980 = vsel %vm976, %v952, %v866
        %v981 = vsel %vm977, %v953, %v867
        %v982 = vpack.c.bf16 %v979, %v978
        %984 = vrot.lane.b32.xlu0 %v982, 64
        %v985 = vpop.permute.xlu0 %984
        %v987 = vsel %vm643, %v985, 0
        %989 = vmatprep.subr.bf16.mxu0 0
        %990 = vmatpush1.bf16.msra.mxu0 0
        %991 = vmatprep.subr.bf16.mxu0 0
        %992 = vmatpush1.bf16.msra.mxu0 0
        %993 = vmatprep.subr.bf16.mxu0 0
        %994 = vmatpush1.bf16.msra.mxu0 0
        %995 = vmatprep.subr.bf16.mxu0 0
        %996 = vmatpush1.bf16.msra.mxu0 0
        %997 = vmatprep.subr.bf16.mxu0 0
        %998 = vmatpush1.bf16.msra.mxu0 0
        %999 = vmatprep.subr.bf16.mxu0 0
        %1000 = vmatpush1.bf16.msra.mxu0 0
        %1001 = vmatprep.subr.bf16.mxu0 0
        %1002 = vmatpush1.bf16.msra.mxu0 %v640
        %1003 = vmatprep.subr.bf16.mxu0 0
        %1004 = vmatpush1.bf16.msra.mxu0 %v639
        %1005 = vmatprep.subr.bf16.mxu0 0
        %1006 = vmatpush2.bf16.msra.mxu0 0
        %1007 = vmatprep.subr.bf16.mxu0 0
        %1008 = vmatpush2.bf16.msra.mxu0 0
        %1009 = vmatprep.subr.bf16.mxu0 0
        %1010 = vmatpush2.bf16.msra.mxu0 0
        %1011 = vmatprep.subr.bf16.mxu0 0
        %1012 = vmatpush2.bf16.msra.mxu0 0
        %1013 = vmatprep.subr.bf16.mxu0 0
        %1014 = vmatpush2.bf16.msra.mxu0 0
        %1015 = vmatprep.subr.bf16.mxu0 0
        %1016 = vmatpush2.bf16.msra.mxu0 0
        %1017 = vmatprep.subr.bf16.mxu0 0
        %1018 = vmatpush2.bf16.msra.mxu0 0
        %1019 = vmatprep.subr.bf16.mxu0 0
        %1020 = vmatpush2.bf16.msra.mxu0 0
        %1021 = vmatprep.mubr.bf16.mxu0 0
        %1022 = vmatmul.mubr.bf16.gmra.mxu0 %v987
        %v1023 = vpop.f32.mrf.mxu0
        %v1024 = vadd.f32 0.0, %v1023
        %v1025 = vpop.f32.mrf.mxu0
        %v1026 = vpop.f32.mrf.mxu0
        %v1027 = vadd.f32 0.0, %v1026
        %v1028 = vpop.f32.mrf.mxu0
        %1029 = vdwg.mxu0
        %v1030 = vadd.f32 %v593, %v1024
        %v1031 = vadd.f32 %v596, %v1027
        %v1032 = vxor.u32 %v1030, 2147483648
        %v1033 = vxor.u32 %v1031, 2147483648
        %v1034 = vmul.f32 %v1032, 1.442695
        %v1035 = vpow.pop %v1034
        %v1036 = vmul.f32 %v1033, 1.442695
        %v1037 = vpow.pop %v1036
        %v1038 = vadd.f32 %v1035, 1.0
        %v1039 = vadd.f32 %v1037, 1.0
        %v1040 = vrcp.pop %v1038
        %v1041 = vmul.f32 1.0, %v1040
        %v1042 = vrcp.pop %v1039
        %v1043 = vmul.f32 1.0, %v1042
        %v1044 = vtanh.pop %v1030
        %v1045 = vtanh.pop %v1031
        %v1046 = vmul.f32 %v1041, %v980
        %v1047 = vmul.f32 %v1043, %v981
        %1050 = vrot.lane.b32.xlu0 %v1044, 32
        %v1051 = vpop.permute.xlu0 %1050
        %1052 = vrot.lane.b32.xlu0 %v1045, 32
        %v1053 = vpop.permute.xlu0 %1052
        %v1056 = vmul.f32 %v1041, %v1051
        %v1057 = vmul.f32 %v1043, %v1053
        %1060 = vrot.lane.b32.xlu0 %v1056, 32
        %v1061 = vpop.permute.xlu0 %1060
        %1062 = vrot.lane.b32.xlu0 %v1057, 32
        %v1063 = vpop.permute.xlu0 %1062
        %v1066 = vadd.f32 %v1046, %v1061
        %v1067 = vadd.f32 %v1047, %v1063
        %v1068 = vtanh.pop %v1066
        %v1069 = vtanh.pop %v1067
        %1072 = vrot.lane.b32.xlu0 %v1068, 32
        %v1073 = vpop.permute.xlu0 %1072
        %1074 = vrot.lane.b32.xlu0 %v1069, 32
        %v1075 = vpop.permute.xlu0 %1074
        %v1078 = vmul.f32 %v1041, %v1073
        %v1079 = vmul.f32 %v1043, %v1075
        %vm1080 = vcmp.gt.s32.totalorder %v300, 3
        %vm1081 = vcmp.gt.s32.totalorder %v301, 3
        %v1082 = vsel %vm1080, 1, 0
        %v1083 = vsel %vm1081, 1, 0
        %1084 = vset.pattern.permute.xlu0 0
        %1085 = vperm.xlu0 %1084, %v1082
        %v1086 = vpop.permute.xlu0 %1085
        %1087 = vset.pattern.permute.xlu0 0
        %1088 = vperm.xlu0 %1087, %v1083
        %v1089 = vpop.permute.xlu0 %1088
        %vm1090 = vcmp.eq.s32.totalorder %v1086, 1
        %vm1091 = vcmp.eq.s32.totalorder %v1089, 1
        %v1092 = vsel %vm1090, %v1078, %v978
        %v1093 = vsel %vm1091, %v1079, %v979
        %v1094 = vsel %vm1090, %v1066, %v980
        %v1095 = vsel %vm1091, %v1067, %v981
        %v1096 = vpack.c.bf16 %v1093, %v1092
        %1098 = vrot.lane.b32.xlu0 %v1096, 64
        %v1099 = vpop.permute.xlu0 %1098
        %v1101 = vsel %vm643, %v1099, 0
        %1103 = vmatprep.subr.bf16.mxu0 0
        %1104 = vmatpush1.bf16.msra.mxu0 0
        %1105 = vmatprep.subr.bf16.mxu0 0
        %1106 = vmatpush1.bf16.msra.mxu0 0
        %1107 = vmatprep.subr.bf16.mxu0 0
        %1108 = vmatpush1.bf16.msra.mxu0 0
        %1109 = vmatprep.subr.bf16.mxu0 0
        %1110 = vmatpush1.bf16.msra.mxu0 0
        %1111 = vmatprep.subr.bf16.mxu0 0
        %1112 = vmatpush1.bf16.msra.mxu0 0
        %1113 = vmatprep.subr.bf16.mxu0 0
        %1114 = vmatpush1.bf16.msra.mxu0 0
        %1115 = vmatprep.subr.bf16.mxu0 0
        %1116 = vmatpush1.bf16.msra.mxu0 %v640
        %1117 = vmatprep.subr.bf16.mxu0 0
        %1118 = vmatpush1.bf16.msra.mxu0 %v639
        %1119 = vmatprep.subr.bf16.mxu0 0
        %1120 = vmatpush2.bf16.msra.mxu0 0
        %1121 = vmatprep.subr.bf16.mxu0 0
        %1122 = vmatpush2.bf16.msra.mxu0 0
        %1123 = vmatprep.subr.bf16.mxu0 0
        %1124 = vmatpush2.bf16.msra.mxu0 0
        %1125 = vmatprep.subr.bf16.mxu0 0
        %1126 = vmatpush2.bf16.msra.mxu0 0
        %1127 = vmatprep.subr.bf16.mxu0 0
        %1128 = vmatpush2.bf16.msra.mxu0 0
        %1129 = vmatprep.subr.bf16.mxu0 0
        %1130 = vmatpush2.bf16.msra.mxu0 0
        %1131 = vmatprep.subr.bf16.mxu0 0
        %1132 = vmatpush2.bf16.msra.mxu0 0
        %1133 = vmatprep.subr.bf16.mxu0 0
        %1134 = vmatpush2.bf16.msra.mxu0 0
        %1135 = vmatprep.mubr.bf16.mxu0 0
        %1136 = vmatmul.mubr.bf16.gmra.mxu0 %v1101
        %v1137 = vpop.f32.mrf.mxu0
        %v1138 = vadd.f32 0.0, %v1137
        %v1139 = vpop.f32.mrf.mxu0
        %v1140 = vpop.f32.mrf.mxu0
        %v1141 = vadd.f32 0.0, %v1140
        %v1142 = vpop.f32.mrf.mxu0
        %1143 = vdwg.mxu0
        %v1144 = vadd.f32 %v601, %v1138
        %v1145 = vadd.f32 %v604, %v1141
        %v1146 = vxor.u32 %v1144, 2147483648
        %v1147 = vxor.u32 %v1145, 2147483648
        %v1148 = vmul.f32 %v1146, 1.442695
        %v1149 = vpow.pop %v1148
        %v1150 = vmul.f32 %v1147, 1.442695
        %v1151 = vpow.pop %v1150
        %v1152 = vadd.f32 %v1149, 1.0
        %v1153 = vadd.f32 %v1151, 1.0
        %v1154 = vrcp.pop %v1152
        %v1155 = vmul.f32 1.0, %v1154
        %v1156 = vrcp.pop %v1153
        %v1157 = vmul.f32 1.0, %v1156
        %v1158 = vtanh.pop %v1144
        %v1159 = vtanh.pop %v1145
        %v1160 = vmul.f32 %v1155, %v1094
        %v1161 = vmul.f32 %v1157, %v1095
        %1164 = vrot.lane.b32.xlu0 %v1158, 32
        %v1165 = vpop.permute.xlu0 %1164
        %1166 = vrot.lane.b32.xlu0 %v1159, 32
        %v1167 = vpop.permute.xlu0 %1166
        %v1170 = vmul.f32 %v1155, %v1165
        %v1171 = vmul.f32 %v1157, %v1167
        %1174 = vrot.lane.b32.xlu0 %v1170, 32
        %v1175 = vpop.permute.xlu0 %1174
        %1176 = vrot.lane.b32.xlu0 %v1171, 32
        %v1177 = vpop.permute.xlu0 %1176
        %v1180 = vadd.f32 %v1160, %v1175
        %v1181 = vadd.f32 %v1161, %v1177
        %v1182 = vtanh.pop %v1180
        %v1183 = vtanh.pop %v1181
        %1186 = vrot.lane.b32.xlu0 %v1182, 32
        %v1187 = vpop.permute.xlu0 %1186
        %1188 = vrot.lane.b32.xlu0 %v1183, 32
        %v1189 = vpop.permute.xlu0 %1188
        %v1192 = vmul.f32 %v1155, %v1187
        %v1193 = vmul.f32 %v1157, %v1189
        %vm1194 = vcmp.gt.s32.totalorder %v300, 4
        %vm1195 = vcmp.gt.s32.totalorder %v301, 4
        %v1196 = vsel %vm1194, 1, 0
        %v1197 = vsel %vm1195, 1, 0
        %1198 = vset.pattern.permute.xlu0 0
        %1199 = vperm.xlu0 %1198, %v1196
        %v1200 = vpop.permute.xlu0 %1199
        %1201 = vset.pattern.permute.xlu0 0
        %1202 = vperm.xlu0 %1201, %v1197
        %v1203 = vpop.permute.xlu0 %1202
        %vm1204 = vcmp.eq.s32.totalorder %v1200, 1
        %vm1205 = vcmp.eq.s32.totalorder %v1203, 1
        %v1206 = vsel %vm1204, %v1192, %v1092
        %v1207 = vsel %vm1205, %v1193, %v1093
        %v1208 = vsel %vm1204, %v1180, %v1094
        %v1209 = vsel %vm1205, %v1181, %v1095
        %v1210 = vpack.c.bf16 %v1207, %v1206
        %1212 = vrot.lane.b32.xlu0 %v1210, 64
        %v1213 = vpop.permute.xlu0 %1212
        %v1215 = vsel %vm643, %v1213, 0
        %1217 = vmatprep.subr.bf16.mxu0 0
        %1218 = vmatpush1.bf16.msra.mxu0 0
        %1219 = vmatprep.subr.bf16.mxu0 0
        %1220 = vmatpush1.bf16.msra.mxu0 0
        %1221 = vmatprep.subr.bf16.mxu0 0
        %1222 = vmatpush1.bf16.msra.mxu0 0
        %1223 = vmatprep.subr.bf16.mxu0 0
        %1224 = vmatpush1.bf16.msra.mxu0 0
        %1225 = vmatprep.subr.bf16.mxu0 0
        %1226 = vmatpush1.bf16.msra.mxu0 0
        %1227 = vmatprep.subr.bf16.mxu0 0
        %1228 = vmatpush1.bf16.msra.mxu0 0
        %1229 = vmatprep.subr.bf16.mxu0 0
        %1230 = vmatpush1.bf16.msra.mxu0 %v640
        %1231 = vmatprep.subr.bf16.mxu0 0
        %1232 = vmatpush1.bf16.msra.mxu0 %v639
        %1233 = vmatprep.subr.bf16.mxu0 0
        %1234 = vmatpush2.bf16.msra.mxu0 0
        %1235 = vmatprep.subr.bf16.mxu0 0
        %1236 = vmatpush2.bf16.msra.mxu0 0
        %1237 = vmatprep.subr.bf16.mxu0 0
        %1238 = vmatpush2.bf16.msra.mxu0 0
        %1239 = vmatprep.subr.bf16.mxu0 0
        %1240 = vmatpush2.bf16.msra.mxu0 0
        %1241 = vmatprep.subr.bf16.mxu0 0
        %1242 = vmatpush2.bf16.msra.mxu0 0
        %1243 = vmatprep.subr.bf16.mxu0 0
        %1244 = vmatpush2.bf16.msra.mxu0 0
        %1245 = vmatprep.subr.bf16.mxu0 0
        %1246 = vmatpush2.bf16.msra.mxu0 0
        %1247 = vmatprep.subr.bf16.mxu0 0
        %1248 = vmatpush2.bf16.msra.mxu0 0
        %1249 = vmatprep.mubr.bf16.mxu0 0
        %1250 = vmatmul.mubr.bf16.gmra.mxu0 %v1215
        %v1251 = vpop.f32.mrf.mxu0
        %v1252 = vadd.f32 0.0, %v1251
        %v1253 = vpop.f32.mrf.mxu0
        %v1254 = vpop.f32.mrf.mxu0
        %v1255 = vadd.f32 0.0, %v1254
        %v1256 = vpop.f32.mrf.mxu0
        %1257 = vdwg.mxu0
        %v1258 = vadd.f32 %v609, %v1252
        %v1259 = vadd.f32 %v612, %v1255
        %v1260 = vxor.u32 %v1258, 2147483648
        %v1261 = vxor.u32 %v1259, 2147483648
        %v1262 = vmul.f32 %v1260, 1.442695
        %v1263 = vpow.pop %v1262
        %v1264 = vmul.f32 %v1261, 1.442695
        %v1265 = vpow.pop %v1264
        %v1266 = vadd.f32 %v1263, 1.0
        %v1267 = vadd.f32 %v1265, 1.0
        %v1268 = vrcp.pop %v1266
        %v1269 = vmul.f32 1.0, %v1268
        %v1270 = vrcp.pop %v1267
        %v1271 = vmul.f32 1.0, %v1270
        %v1272 = vtanh.pop %v1258
        %v1273 = vtanh.pop %v1259
        %v1274 = vmul.f32 %v1269, %v1208
        %v1275 = vmul.f32 %v1271, %v1209
        %1278 = vrot.lane.b32.xlu0 %v1272, 32
        %v1279 = vpop.permute.xlu0 %1278
        %1280 = vrot.lane.b32.xlu0 %v1273, 32
        %v1281 = vpop.permute.xlu0 %1280
        %v1284 = vmul.f32 %v1269, %v1279
        %v1285 = vmul.f32 %v1271, %v1281
        %1288 = vrot.lane.b32.xlu0 %v1284, 32
        %v1289 = vpop.permute.xlu0 %1288
        %1290 = vrot.lane.b32.xlu0 %v1285, 32
        %v1291 = vpop.permute.xlu0 %1290
        %v1294 = vadd.f32 %v1274, %v1289
        %v1295 = vadd.f32 %v1275, %v1291
        %v1296 = vtanh.pop %v1294
        %v1297 = vtanh.pop %v1295
        %1300 = vrot.lane.b32.xlu0 %v1296, 32
        %v1301 = vpop.permute.xlu0 %1300
        %1302 = vrot.lane.b32.xlu0 %v1297, 32
        %v1303 = vpop.permute.xlu0 %1302
        %v1306 = vmul.f32 %v1269, %v1301
        %v1307 = vmul.f32 %v1271, %v1303
        %vm1308 = vcmp.gt.s32.totalorder %v300, 5
        %vm1309 = vcmp.gt.s32.totalorder %v301, 5
        %v1310 = vsel %vm1308, 1, 0
        %v1311 = vsel %vm1309, 1, 0
        %1312 = vset.pattern.permute.xlu0 0
        %1313 = vperm.xlu0 %1312, %v1310
        %v1314 = vpop.permute.xlu0 %1313
        %1315 = vset.pattern.permute.xlu0 0
        %1316 = vperm.xlu0 %1315, %v1311
        %v1317 = vpop.permute.xlu0 %1316
        %vm1318 = vcmp.eq.s32.totalorder %v1314, 1
        %vm1319 = vcmp.eq.s32.totalorder %v1317, 1
        %v1320 = vsel %vm1318, %v1306, %v1206
        %v1321 = vsel %vm1319, %v1307, %v1207
        %v1322 = vsel %vm1318, %v1294, %v1208
        %v1323 = vsel %vm1319, %v1295, %v1209
        %v1324 = vpack.c.bf16 %v1321, %v1320
        %1326 = vrot.lane.b32.xlu0 %v1324, 64
        %v1327 = vpop.permute.xlu0 %1326
        %v1329 = vsel %vm643, %v1327, 0
        %1331 = vmatprep.subr.bf16.mxu0 0
        %1332 = vmatpush1.bf16.msra.mxu0 0
        %1333 = vmatprep.subr.bf16.mxu0 0
        %1334 = vmatpush1.bf16.msra.mxu0 0
        %1335 = vmatprep.subr.bf16.mxu0 0
        %1336 = vmatpush1.bf16.msra.mxu0 0
        %1337 = vmatprep.subr.bf16.mxu0 0
        %1338 = vmatpush1.bf16.msra.mxu0 0
        %1339 = vmatprep.subr.bf16.mxu0 0
        %1340 = vmatpush1.bf16.msra.mxu0 0
        %1341 = vmatprep.subr.bf16.mxu0 0
        %1342 = vmatpush1.bf16.msra.mxu0 0
        %1343 = vmatprep.subr.bf16.mxu0 0
        %1344 = vmatpush1.bf16.msra.mxu0 %v640
        %1345 = vmatprep.subr.bf16.mxu0 0
        %1346 = vmatpush1.bf16.msra.mxu0 %v639
        %1347 = vmatprep.subr.bf16.mxu0 0
        %1348 = vmatpush2.bf16.msra.mxu0 0
        %1349 = vmatprep.subr.bf16.mxu0 0
        %1350 = vmatpush2.bf16.msra.mxu0 0
        %1351 = vmatprep.subr.bf16.mxu0 0
        %1352 = vmatpush2.bf16.msra.mxu0 0
        %1353 = vmatprep.subr.bf16.mxu0 0
        %1354 = vmatpush2.bf16.msra.mxu0 0
        %1355 = vmatprep.subr.bf16.mxu0 0
        %1356 = vmatpush2.bf16.msra.mxu0 0
        %1357 = vmatprep.subr.bf16.mxu0 0
        %1358 = vmatpush2.bf16.msra.mxu0 0
        %1359 = vmatprep.subr.bf16.mxu0 0
        %1360 = vmatpush2.bf16.msra.mxu0 0
        %1361 = vmatprep.subr.bf16.mxu0 0
        %1362 = vmatpush2.bf16.msra.mxu0 0
        %1363 = vmatprep.mubr.bf16.mxu0 0
        %1364 = vmatmul.mubr.bf16.gmra.mxu0 %v1329
        %v1365 = vpop.f32.mrf.mxu0
        %v1366 = vadd.f32 0.0, %v1365
        %v1367 = vpop.f32.mrf.mxu0
        %v1368 = vpop.f32.mrf.mxu0
        %v1369 = vadd.f32 0.0, %v1368
        %v1370 = vpop.f32.mrf.mxu0
        %1371 = vdwg.mxu0
        %v1372 = vadd.f32 %v617, %v1366
        %v1373 = vadd.f32 %v620, %v1369
        %v1374 = vxor.u32 %v1372, 2147483648
        %v1375 = vxor.u32 %v1373, 2147483648
        %v1376 = vmul.f32 %v1374, 1.442695
        %v1377 = vpow.pop %v1376
        %v1378 = vmul.f32 %v1375, 1.442695
        %v1379 = vpow.pop %v1378
        %v1380 = vadd.f32 %v1377, 1.0
        %v1381 = vadd.f32 %v1379, 1.0
        %v1382 = vrcp.pop %v1380
        %v1383 = vmul.f32 1.0, %v1382
        %v1384 = vrcp.pop %v1381
        %v1385 = vmul.f32 1.0, %v1384
        %v1386 = vtanh.pop %v1372
        %v1387 = vtanh.pop %v1373
        %v1388 = vmul.f32 %v1383, %v1322
        %v1389 = vmul.f32 %v1385, %v1323
        %1392 = vrot.lane.b32.xlu0 %v1386, 32
        %v1393 = vpop.permute.xlu0 %1392
        %1394 = vrot.lane.b32.xlu0 %v1387, 32
        %v1395 = vpop.permute.xlu0 %1394
        %v1398 = vmul.f32 %v1383, %v1393
        %v1399 = vmul.f32 %v1385, %v1395
        %1402 = vrot.lane.b32.xlu0 %v1398, 32
        %v1403 = vpop.permute.xlu0 %1402
        %1404 = vrot.lane.b32.xlu0 %v1399, 32
        %v1405 = vpop.permute.xlu0 %1404
        %v1408 = vadd.f32 %v1388, %v1403
        %v1409 = vadd.f32 %v1389, %v1405
        %v1410 = vtanh.pop %v1408
        %v1411 = vtanh.pop %v1409
        %1414 = vrot.lane.b32.xlu0 %v1410, 32
        %v1415 = vpop.permute.xlu0 %1414
        %1416 = vrot.lane.b32.xlu0 %v1411, 32
        %v1417 = vpop.permute.xlu0 %1416
        %v1420 = vmul.f32 %v1383, %v1415
        %v1421 = vmul.f32 %v1385, %v1417
        %vm1422 = vcmp.gt.s32.totalorder %v300, 6
        %vm1423 = vcmp.gt.s32.totalorder %v301, 6
        %v1424 = vsel %vm1422, 1, 0
        %v1425 = vsel %vm1423, 1, 0
        %1426 = vset.pattern.permute.xlu0 0
        %1427 = vperm.xlu0 %1426, %v1424
        %v1428 = vpop.permute.xlu0 %1427
        %1429 = vset.pattern.permute.xlu0 0
        %1430 = vperm.xlu0 %1429, %v1425
        %v1431 = vpop.permute.xlu0 %1430
        %vm1432 = vcmp.eq.s32.totalorder %v1428, 1
        %vm1433 = vcmp.eq.s32.totalorder %v1431, 1
        %v1434 = vsel %vm1432, %v1420, %v1320
        %v1435 = vsel %vm1433, %v1421, %v1321
        %v1436 = vsel %vm1432, %v1408, %v1322
        %v1437 = vsel %vm1433, %v1409, %v1323
        %v1438 = vpack.c.bf16 %v1435, %v1434
        %1440 = vrot.lane.b32.xlu0 %v1438, 64
        %v1441 = vpop.permute.xlu0 %1440
        %v1443 = vsel %vm643, %v1441, 0
        %1445 = vmatprep.subr.bf16.mxu0 0
        %1446 = vmatpush1.bf16.msra.mxu0 0
        %1447 = vmatprep.subr.bf16.mxu0 0
        %1448 = vmatpush1.bf16.msra.mxu0 0
        %1449 = vmatprep.subr.bf16.mxu0 0
        %1450 = vmatpush1.bf16.msra.mxu0 0
        %1451 = vmatprep.subr.bf16.mxu0 0
        %1452 = vmatpush1.bf16.msra.mxu0 0
        %1453 = vmatprep.subr.bf16.mxu0 0
        %1454 = vmatpush1.bf16.msra.mxu0 0
        %1455 = vmatprep.subr.bf16.mxu0 0
        %1456 = vmatpush1.bf16.msra.mxu0 0
        %1457 = vmatprep.subr.bf16.mxu0 0
        %1458 = vmatpush1.bf16.msra.mxu0 %v640
        %1459 = vmatprep.subr.bf16.mxu0 0
        %1460 = vmatpush1.bf16.msra.mxu0 %v639
        %1461 = vmatprep.subr.bf16.mxu0 0
        %1462 = vmatpush2.bf16.msra.mxu0 0
        %1463 = vmatprep.subr.bf16.mxu0 0
        %1464 = vmatpush2.bf16.msra.mxu0 0
        %1465 = vmatprep.subr.bf16.mxu0 0
        %1466 = vmatpush2.bf16.msra.mxu0 0
        %1467 = vmatprep.subr.bf16.mxu0 0
        %1468 = vmatpush2.bf16.msra.mxu0 0
        %1469 = vmatprep.subr.bf16.mxu0 0
        %1470 = vmatpush2.bf16.msra.mxu0 0
        %1471 = vmatprep.subr.bf16.mxu0 0
        %1472 = vmatpush2.bf16.msra.mxu0 0
        %1473 = vmatprep.subr.bf16.mxu0 0
        %1474 = vmatpush2.bf16.msra.mxu0 0
        %1475 = vmatprep.subr.bf16.mxu0 0
        %1476 = vmatpush2.bf16.msra.mxu0 0
        %1477 = vmatprep.mubr.bf16.mxu0 0
        %1478 = vmatmul.mubr.bf16.gmra.mxu0 %v1443
        %v1479 = vpop.f32.mrf.mxu0
        %v1480 = vadd.f32 0.0, %v1479
        %v1481 = vpop.f32.mrf.mxu0
        %v1482 = vpop.f32.mrf.mxu0
        %v1483 = vadd.f32 0.0, %v1482
        %v1484 = vpop.f32.mrf.mxu0
        %1485 = vdwg.mxu0
        %v1486 = vadd.f32 %v625, %v1480
        %v1487 = vadd.f32 %v628, %v1483
        %v1488 = vxor.u32 %v1486, 2147483648
        %v1489 = vxor.u32 %v1487, 2147483648
        %v1490 = vmul.f32 %v1488, 1.442695
        %v1491 = vpow.pop %v1490
        %v1492 = vmul.f32 %v1489, 1.442695
        %v1493 = vpow.pop %v1492
        %v1494 = vadd.f32 %v1491, 1.0
        %v1495 = vadd.f32 %v1493, 1.0
        %v1496 = vrcp.pop %v1494
        %v1497 = vmul.f32 1.0, %v1496
        %v1498 = vrcp.pop %v1495
        %v1499 = vmul.f32 1.0, %v1498
        %v1500 = vtanh.pop %v1486
        %v1501 = vtanh.pop %v1487
        %v1502 = vmul.f32 %v1497, %v1436
        %v1503 = vmul.f32 %v1499, %v1437
        %1506 = vrot.lane.b32.xlu0 %v1500, 32
        %v1507 = vpop.permute.xlu0 %1506
        %1508 = vrot.lane.b32.xlu0 %v1501, 32
        %v1509 = vpop.permute.xlu0 %1508
        %v1512 = vmul.f32 %v1497, %v1507
        %v1513 = vmul.f32 %v1499, %v1509
        %1516 = vrot.lane.b32.xlu0 %v1512, 32
        %v1517 = vpop.permute.xlu0 %1516
        %1518 = vrot.lane.b32.xlu0 %v1513, 32
        %v1519 = vpop.permute.xlu0 %1518
        %v1522 = vadd.f32 %v1502, %v1517
        %v1523 = vadd.f32 %v1503, %v1519
        %v1524 = vtanh.pop %v1522
        %v1525 = vtanh.pop %v1523
        %1528 = vrot.lane.b32.xlu0 %v1524, 32
        %v1529 = vpop.permute.xlu0 %1528
        %1530 = vrot.lane.b32.xlu0 %v1525, 32
        %v1531 = vpop.permute.xlu0 %1530
        %v1534 = vmul.f32 %v1497, %v1529
        %v1535 = vmul.f32 %v1499, %v1531
        %vm1536 = vcmp.gt.s32.totalorder %v300, 7
        %vm1537 = vcmp.gt.s32.totalorder %v301, 7
        %v1538 = vsel %vm1536, 1, 0
        %v1539 = vsel %vm1537, 1, 0
        %1540 = vset.pattern.permute.xlu0 0
        %1541 = vperm.xlu0 %1540, %v1538
        %v1542 = vpop.permute.xlu0 %1541
        %1543 = vset.pattern.permute.xlu0 0
        %1544 = vperm.xlu0 %1543, %v1539
        %v1545 = vpop.permute.xlu0 %1544
        %vm1546 = vcmp.eq.s32.totalorder %v1542, 1
        %vm1547 = vcmp.eq.s32.totalorder %v1545, 1
        %v1548 = vsel %vm1546, %v1534, %v1434
        %v1549 = vsel %vm1547, %v1535, %v1435
        %v1550 = vld [vmem:[%s296] sm:$0xff]
        %v1551 = vld [vmem:[%s296 + $0x8] sm:$0xff]
        %1554 = vrot.lane.b32.xlu0 %v1548, 32
        %v1555 = vpop.permute.xlu0 %1554
        %1556 = vrot.lane.b32.xlu0 %v1549, 32
        %v1557 = vpop.permute.xlu0 %1556
        %vm1560 = vcmask 785408
        %v1561 = vsel %vm1560, %v1550, %v1555
        %v1562 = vsel %vm1560, %v1551, %v1557
        %s1563 = sld [smem:[#allocation3]]
        %s1564 = smul.u32 %s22, 16
        %v1565 = vlaneseq
        %v1566 = vshrl.u32 %v1565, 7
        %v1567 = vadd.s32 %v1566, 8
        %v1568 = vstv %s1564
        %v1569 = vadd.s32 %v1566, %v1568
        %v1570 = vadd.s32 %v1567, %v1568
        %v1571 = vmul.u32 %v1569, 2654435761
        %v1572 = vmul.u32 %v1570, 2654435761
        %v1573 = vmul.u32 %v345, 2246822519
        %v1574 = vxor.u32 %v1571, %v1573
        %v1575 = vxor.u32 %v1572, %v1573
        %v1576 = vstv %s1563
        %v1577 = vxor.u32 %v1574, %v1576
        %v1578 = vxor.u32 %v1575, %v1576
        %v1579 = vshrl.u32 %v1577, 16
        %v1580 = vshrl.u32 %v1578, 16
        %v1581 = vxor.u32 %v1577, %v1579
        %v1582 = vxor.u32 %v1578, %v1580
        %v1583 = vmul.u32 %v1581, 2146121005
        %v1584 = vmul.u32 %v1582, 2146121005
        %v1585 = vshrl.u32 %v1583, 15
        %v1586 = vshrl.u32 %v1584, 15
        %v1587 = vxor.u32 %v1583, %v1585
        %v1588 = vxor.u32 %v1584, %v1586
        %v1589 = vmul.u32 %v1587, 2221713035
        %v1590 = vmul.u32 %v1588, 2221713035
        %v1591 = vshrl.u32 %v1589, 16
        %v1592 = vshrl.u32 %v1590, 16
        %v1593 = vxor.u32 %v1589, %v1591
        %v1594 = vxor.u32 %v1590, %v1592
        %v1595 = vand.u32 %v1593, 2147483647
        %v1596 = vand.u32 %v1594, 2147483647
        %vm1597 = vcmp.ge.s32.totalorder %v1595, 1073741824
        %vm1598 = vcmp.ge.s32.totalorder %v1596, 1073741824
        %v1599 = vsel %vm1597, 1, 0
        %v1600 = vsel %vm1598, 1, 0
        %v1601 = vcvt.s32.f32 %v1599
        %v1602 = vcvt.s32.f32 %v1600
        %v1603 = vmul.f32 %v1561, %v1601
        %v1604 = vmul.f32 %v1562, %v1602
        %v1605 = vmul.f32 %v1603, 2.0
        %v1606 = vmul.f32 %v1604, 2.0
        %1607 = vst [vmem:[%s279] sm:$0xff] %v1605
        %1608 = vst [vmem:[%s279 + $0x8] sm:$0xff] %v1606
        %s1609 = sand.u32 %s171, 1
        %s1610 = scalar_lea.sflag [#allocation5], %s1609
        %s1611 = sand.u32 %s171, 1
        %s1612 = smul.addr %s1611, 16
        %s1613 = scalar_lea.vmem [#allocation4], %s1612
        // Predicated region
        $region45: #{tpu_custom_call.1} parent=43 // pred_check
          %p1614 = pneg %p181
        $region46: #{tpu_custom_call.1} parent=43 // pred_check_branch
          %1616 = sbr.rel (%p1614) target = $region48
        $region47: #{tpu_custom_call.1} parent=43 // pred_region
          %s1617 = smul.u32 2, %s22
          %s1619 = ssub.s32 256, 256
          %1620 = vsyncadd %s1610, %s1619
          %s1621 = smul.addr %s1617, 128
          %s1622 = scalar_lea.hbm %s7, %s1621
          %s1623 = sshll.u32 %s1613, 4
          %s1624 = int_to_ptr.vmem [resolvable:$true] %s1623
          %1629 = dma.vmem_to_hbm [thread:$0]  %s1624, 256, %s1622, %s1610, 128, 128, 8
        $region48: #{tpu_custom_call.1} parent=43 // pred_fallthru
          _
      $region44: #{tpu_custom_call.1} parent=5 // pred_fallthru
        _
      %p1630 = scmp.le.s32.totalorder 2, %s17
      // Predicated region
      $region49: #{tpu_custom_call.1} parent=5 // pred_check
        %p1631 = pneg %p1630
      $region50: #{tpu_custom_call.1} parent=5 // pred_check_branch
        %1633 = sbr.rel (%p1631) target = $region52
      $region51: #{tpu_custom_call.1} parent=5 // pred_region
        %s1634 = ssub.s32 %s17, 2
        // Predicated region
        $region53: #{tpu_custom_call.1} parent=51 // pred_check
          %p1635 = pneg %p187
        $region54: #{tpu_custom_call.1} parent=51 // pred_check_branch
          %1637 = sbr.rel (%p1635) target = $region56
        $region55: #{tpu_custom_call.1} parent=51 // pred_region
          %s1638 = sand.u32 %s172, 1
          %s1639 = scalar_lea.sflag [#allocation5], %s1638
          %s1640 = sand.u32 %s172, 1
          %s1641 = smul.addr %s1640, 16
          %s1642 = scalar_lea.vmem [#allocation4], %s1641
          %1643 = dma.done %s1639, 256
        $region56: #{tpu_custom_call.1} parent=51 // pred_fallthru
          _
      $region52: #{tpu_custom_call.1} parent=5 // pred_fallthru
        _
    $region6: #{tpu_custom_call.1} parent=1 // loop_footer
      %s21 = sadd.s32 1, %s17
    $region7: #{tpu_custom_call.1} parent=1 // loop_footer_branch
      %16 = sbr.rel target = $region3
    $region8: #{tpu_custom_call.1} parent=1 // loop_exit
      _
    %1644 = vsyncpa [#allocation5], 1
    %s1645 = scalar_lea.sflag [#allocation5], 1
    %1646 = vsyncpa %s1645, 1

</llo_original>
